<compile_context>
chip_gen: v5e
topology: v5e:2x2
jax: 0.10.0
libtpu: 0.0.40
codegen_flags: <defaults>
</compile_context>

<pallas_src>
import functools

import jax
import jax.numpy as jnp
from jax.experimental import pallas as pl
from jax.experimental.pallas import tpu as pltpu


def _round_up(x, m):
    return (x + m - 1) // m * m


def _largest_divisor(n, candidates):
    for c in candidates:
        if n % c == 0:
            return c
    return n


# ----------------------------------------------------------------------------
# Pallas kernels
# ----------------------------------------------------------------------------
def _matmul_kernel(a_ref, b_ref, s_ref, c_ref, o_ref, *, apply_relu, nsteps):
    """bf16 MXU matmul accumulating into the resident f32 output block; fused
    per-channel scale/bias (+ReLU) epilogue on the last reduction step."""
    k = pl.program_id(2)

    @pl.when(k == 0)
    def _():
        o_ref[...] = jnp.zeros_like(o_ref)

    o_ref[...] += jnp.dot(a_ref[...], b_ref[...],
                          preferred_element_type=jnp.float32)

    @pl.when(k == nsteps - 1)
    def _():
        out = o_ref[...] * s_ref[...] + c_ref[...]
        if apply_relu:
            out = jnp.maximum(out, 0.0)
        o_ref[...] = out


def matmul_scale_bias_act(a, b, scale, bias, relu):
    """(M,K) @ (K,N) in bf16 with f32 accumulation, then per-output-channel
    scale/bias (+ReLU).  M, N and K are all tiled; 256x256 MXU tiles where the
    padded extents allow it (v6e/v7x), 128 otherwise (v5e-native)."""
    M, K = a.shape
    _, N = b.shape

    K_pad = _round_up(K, 128)
    N_pad = _round_up(N, 128)
    TK = 256 if K_pad % 256 == 0 else 128
    TN = 256 if N_pad % 256 == 0 else 128
    M16 = _round_up(M, 16)            # bf16 sublane packing for the A operand
    TM = min(512, M16)
    M_pad = _round_up(M, TM)
    nk = K_pad // TK

    a_p = a.astype(jnp.bfloat16)
    if (M_pad, K_pad) != (M, K):
        a_p = jnp.pad(a_p, ((0, M_pad - M), (0, K_pad - K)))
    b_p = b.astype(jnp.bfloat16)
    if (K_pad, N_pad) != (K, N):
        b_p = jnp.pad(b_p, ((0, K_pad - K), (0, N_pad - N)))
    s_p = scale.reshape(1, N).astype(jnp.float32)
    c_p = bias.reshape(1, N).astype(jnp.float32)
    if N_pad != N:
        s_p = jnp.pad(s_p, ((0, 0), (0, N_pad - N)))
        c_p = jnp.pad(c_p, ((0, 0), (0, N_pad - N)))

    out = pl.pallas_call(
        functools.partial(_matmul_kernel, apply_relu=relu, nsteps=nk),
        out_shape=jax.ShapeDtypeStruct((M_pad, N_pad), jnp.float32),
        grid=(M_pad // TM, N_pad // TN, nk),
        in_specs=[
            pl.BlockSpec((TM, TK), lambda i, j, k: (i, k)),
            pl.BlockSpec((TK, TN), lambda i, j, k: (k, j)),
            pl.BlockSpec((1, TN), lambda i, j, k: (0, j)),
            pl.BlockSpec((1, TN), lambda i, j, k: (0, j)),
        ],
        out_specs=pl.BlockSpec((TM, TN), lambda i, j, k: (i, j)),
        compiler_params=pltpu.CompilerParams(
            dimension_semantics=("parallel", "parallel", "arbitrary")),
    )(a_p, b_p, s_p, c_p)
    if (M_pad, N_pad) != (M, N):
        out = out[:M, :N]
    return out


def _add_relu_kernel(a_ref, b_ref, o_ref):
    o_ref[...] = jnp.maximum(a_ref[...] + b_ref[...], 0.0)


def add_relu(a, b):
    """Elementwise relu(a + b) (residual join).  Both operands are flattened
    into a lane-dense (rows, 512) slab and row-tiled so stores are unmasked
    even for 64-channel layers and the kernel pipelines / shards over TCs."""
    shape = a.shape
    total = a.size
    LANE = 512
    a_f = a.reshape(-1)
    b_f = b.reshape(-1)
    chunk = 8 * LANE
    total_pad = _round_up(total, chunk)
    if total_pad != total:
        a_f = jnp.pad(a_f, (0, total_pad - total))
        b_f = jnp.pad(b_f, (0, total_pad - total))
    rows = total_pad // LANE
    TR = _largest_divisor(rows, (1024, 512, 256, 128, 64, 32, 16, 8))

    out = pl.pallas_call(
        _add_relu_kernel,
        out_shape=jax.ShapeDtypeStruct((rows, LANE), jnp.float32),
        grid=(rows // TR,),
        in_specs=[pl.BlockSpec((TR, LANE), lambda i: (i, 0))] * 2,
        out_specs=pl.BlockSpec((TR, LANE), lambda i: (i, 0)),
        compiler_params=pltpu.CompilerParams(
            dimension_semantics=("parallel",)),
    )(a_f.reshape(rows, LANE), b_f.reshape(rows, LANE))
    out = out.reshape(-1)
    if total_pad != total:
        out = out[:total]
    return out.reshape(shape)


def _avgpool_kernel(x_ref, o_ref, *, denom, nsteps):
    j = pl.program_id(0)

    @pl.when(j == 0)
    def _():
        o_ref[...] = jnp.zeros_like(o_ref)

    o_ref[...] += jnp.sum(x_ref[...], axis=1)

    @pl.when(j == nsteps - 1)
    def _():
        o_ref[...] = o_ref[...] * (1.0 / denom)


def global_avg_pool(x):
    """x (N, L, C) -> (N, C), mean over L (AdaptiveAvgPool3d(1)).  Reduction is
    tiled over L with the (N, C) output block resident as the accumulator."""
    N, L, C = x.shape
    C_pad = _round_up(C, 128)
    if C_pad != C:
        x = jnp.pad(x, ((0, 0), (0, 0), (0, C_pad - C)))
    if L % 8 == 0:
        TL = _largest_divisor(L, (512, 256, 128, 64, 32, 16, 8))
    else:
        TL = L  # small / ragged L: single full-extent block
    nsteps = L // TL

    out = pl.pallas_call(
        functools.partial(_avgpool_kernel, denom=float(L), nsteps=nsteps),
        out_shape=jax.ShapeDtypeStruct((N, C_pad), jnp.float32),
        grid=(nsteps,),
        in_specs=[pl.BlockSpec((N, TL, C_pad), lambda j: (0, j, 0))],
        out_specs=pl.BlockSpec((N, C_pad), lambda j: (0, 0)),
        compiler_params=pltpu.CompilerParams(
            dimension_semantics=("arbitrary",)),
    )(x)
    return out[:, :C] if C_pad != C else out


# ----------------------------------------------------------------------------
# Conv wrappers (im2col glue in plain JAX, matmul in Pallas)
# ----------------------------------------------------------------------------
# TODO(synk): replace materialized im2col with an implicit-GEMM Pallas kernel
# (tap index as an extra reduction grid axis reading shifted windows straight
# from HBM) to remove the k*k activation blow-up, especially for the 7x7 stem.
def conv_spatial(x, w, stride, pad, k, scale, bias, relu):
    """Conv3d with kernel (1,k,k), stride (1,s,s), pad (0,p,p). x: (N,T,H,W,C)."""
    N, T, H, W, C = x.shape
    x = x.astype(jnp.bfloat16)          # halve the im2col intermediate bytes
    xp = jnp.pad(x, ((0, 0), (0, 0), (pad, pad), (pad, pad), (0, 0)))
    Ho = (H + 2 * pad - k) // stride + 1
    Wo = (W + 2 * pad - k) // stride + 1
    pats = []
    for dh in range(k):
        for dw in range(k):
            pats.append(xp[:, :, dh:dh + stride * Ho:stride,
                           dw:dw + stride * Wo:stride, :])
    p = jnp.stack(pats, axis=4)                          # (N,T,Ho,Wo,k*k,C)
    a = p.reshape(N * T * Ho * Wo, k * k * C)
    out = matmul_scale_bias_act(a, w, scale, bias, relu)
    return out.reshape(N, T, Ho, Wo, w.shape[1])


def conv_temporal(x, w, stride, pad, k, scale, bias, relu):
    """Conv3d with kernel (k,1,1), stride (s,1,1), pad (p,0,0). x: (N,T,H,W,C)."""
    N, T, H, W, C = x.shape
    x = x.astype(jnp.bfloat16)
    xp = jnp.pad(x, ((0, 0), (pad, pad), (0, 0), (0, 0), (0, 0)))
    To = (T + 2 * pad - k) // stride + 1
    pats = [xp[:, dt:dt + stride * To:stride, :, :, :] for dt in range(k)]
    p = jnp.stack(pats, axis=4)                          # (N,To,H,W,k,C)
    a = p.reshape(N * To * H * W, k * C)
    out = matmul_scale_bias_act(a, w, scale, bias, relu)
    return out.reshape(N, To, H, W, w.shape[1])


def conv_1x1x1(x, w, stride, scale, bias, relu):
    """Conv3d kernel 1, stride (s,s,s) — downsample branch. x: (N,T,H,W,C)."""
    xs = x[:, ::stride, ::stride, ::stride, :]
    N, T, H, W, C = xs.shape
    out = matmul_scale_bias_act(xs.reshape(N * T * H * W, C), w, scale, bias, relu)
    return out.reshape(N, T, H, W, w.shape[1])


# ----------------------------------------------------------------------------
# Deterministic parameter construction (synthetic — no checkpoint loading)
# ----------------------------------------------------------------------------
class _Keys:
    def __init__(self, key):
        self._key = key
        self._i = 0

    def __call__(self):
        self._i += 1
        return jax.random.fold_in(self._key, self._i)


def _conv_w(kg, k_elems, c_out):
    std = (2.0 / k_elems) ** 0.5
    return std * jax.random.normal(kg(), (k_elems, c_out), jnp.float32)


def _bn_affine(kg, c):
    # eval-mode BatchNorm3d folded into per-channel scale/bias
    # (running_mean = 0, running_var = 1, eps = 1e-5, random gamma/beta).
    gamma = 1.0 + 0.1 * jax.random.normal(kg(), (c,), jnp.float32)
    beta = 0.01 * jax.random.normal(kg(), (c,), jnp.float32)
    scale = gamma / jnp.sqrt(1.0 + 1e-5)
    bias = beta
    return scale, bias


def _make_conv2plus1d(kg, c_in, c_out, mid):
    w_s = _conv_w(kg, 3 * 3 * c_in, mid)          # (1,3,3) spatial conv
    s_s, b_s = _bn_affine(kg, mid)                # BN(mid) inside Conv2Plus1D
    w_t = _conv_w(kg, 3 * mid, c_out)             # (3,1,1) temporal conv
    s_t, b_t = _bn_affine(kg, c_out)              # outer BN(planes) of the block
    return dict(w_s=w_s, s_s=s_s, b_s=b_s, w_t=w_t, s_t=s_t, b_t=b_t)


def _make_block(kg, c_in, c_out, stride):
    mid = (c_in * c_out * 3 * 3 * 3) // (c_in * 3 * 3 + 3 * c_out)
    p = dict(conv1=_make_conv2plus1d(kg, c_in, c_out, mid),
             conv2=_make_conv2plus1d(kg, c_out, c_out, mid),
             stride=stride)
    if stride != 1 or c_in != c_out:
        w_d = _conv_w(kg, c_in, c_out)
        s_d, b_d = _bn_affine(kg, c_out)
        p['down'] = dict(w=w_d, s=s_d, b=b_d)
    return p


def make_params(key, num_classes):
    kg = _Keys(key)
    params = {}
    # R2Plus1dStem: (1,7,7)/s(1,2,2) 3->45 + BN + ReLU, (3,1,1) 45->64 + BN + ReLU
    w_ss = _conv_w(kg, 7 * 7 * 3, 45)
    s_ss, b_ss = _bn_affine(kg, 45)
    w_st = _conv_w(kg, 3 * 45, 64)
    s_st, b_st = _bn_affine(kg, 64)
    params['stem'] = dict(w_s=w_ss, s_s=s_ss, b_s=b_ss, w_t=w_st, s_t=s_st, b_t=b_st)

    cfg = [(64, 64, 1), (64, 128, 2), (128, 256, 2), (256, 512, 2)]
    for li, (c_in, c_out, stride) in enumerate(cfg, start=1):
        params[f'layer{li}'] = [_make_block(kg, c_in, c_out, stride),
                                _make_block(kg, c_out, c_out, 1)]

    std = (1.0 / 512) ** 0.5
    params['fc'] = dict(w=std * jax.random.normal(kg(), (512, num_classes), jnp.float32),
                        b=0.01 * jax.random.normal(kg(), (num_classes,), jnp.float32))
    return params


# ----------------------------------------------------------------------------
# Model forward
# ----------------------------------------------------------------------------
def _conv2plus1d_apply(x, p, stride, final_relu):
    # Conv2Plus1D: spatial conv -> BN(mid) -> ReLU -> temporal conv; the
    # trailing BN/ReLU of the enclosing Sequential is fused here as well.
    x = conv_spatial(x, p['w_s'], stride, 1, 3, p['s_s'], p['b_s'], relu=True)
    x = conv_temporal(x, p['w_t'], stride, 1, 3, p['s_t'], p['b_t'], relu=final_relu)
    return x


def _basic_block(x, p):
    stride = p['stride']
    out = _conv2plus1d_apply(x, p['conv1'], stride, final_relu=True)
    out = _conv2plus1d_apply(out, p['conv2'], 1, final_relu=False)
    if 'down' in p:
        identity = conv_1x1x1(x, p['down']['w'], stride,
                              p['down']['s'], p['down']['b'], relu=False)
    else:
        identity = x
    return add_relu(out, identity)


def r2plus1d_18_forward(params, x_ncdhw):
    """x_ncdhw: (N, C=3, T, H, W) float32 -> logits (N, num_classes)."""
    x = jnp.transpose(x_ncdhw.astype(jnp.float32), (0, 2, 3, 4, 1))  # NCDHW -> NTHWC
    st = params['stem']
    x = conv_spatial(x, st['w_s'], 2, 3, 7, st['s_s'], st['b_s'], relu=True)
    x = conv_temporal(x, st['w_t'], 1, 1, 3, st['s_t'], st['b_t'], relu=True)
    for name in ('layer1', 'layer2', 'layer3', 'layer4'):
        for blk in params[name]:
            x = _basic_block(x, blk)
    N, T, H, W, C = x.shape
    pooled = global_avg_pool(x.reshape(N, T * H * W, C))             # (N, 512)
    fc = params['fc']
    ones = jnp.ones((fc['w'].shape[1],), jnp.float32)
    return matmul_scale_bias_act(pooled, fc['w'], ones, fc['b'], relu=False)


if __name__ == "__main__":
    key = jax.random.PRNGKey(0)
    num_classes = 10
    params = make_params(key, num_classes)
    # small clip: batch=2, 3 channels, 4 frames, 16x16 spatial
    x = jax.random.normal(jax.random.fold_in(key, 12345), (2, 3, 4, 16, 16), jnp.float32)
    out = r2plus1d_18_forward(params, x)
    out = jax.block_until_ready(out)
    assert out.shape == (2, num_classes), out.shape
    assert bool(jnp.all(jnp.isfinite(out)))
    print("KERNEL_OK")
</pallas_src>

<mosaic_0001>
module attributes {stable_mosaic.version = 11 : i64} {
  func.func @_matmul_kernel(%arg0: i32, %arg1: i32, %arg2: i32, %arg3: memref<512x256xbf16, #tpu.memory_space<vmem>>, %arg4: memref<256x128xbf16, #tpu.memory_space<vmem>>, %arg5: memref<1x128xf32, #tpu.memory_space<vmem>>, %arg6: memref<1x128xf32, #tpu.memory_space<vmem>>, %arg7: memref<512x128xf32, #tpu.memory_space<vmem>>) attributes {dimension_semantics = [#tpu.dimension_semantics<parallel>, #tpu.dimension_semantics<parallel>, #tpu.dimension_semantics<arbitrary>], iteration_bounds = array<i64: 1, 1, 1>, scalar_prefetch = 0 : i64, scratch_operands = 0 : i64, tpu.core_type = #tpu.core_type<tc>, window_params = [{transform_indices = @transform_0, window_bounds = array<i64: 512, 256>}, {transform_indices = @transform_1, window_bounds = array<i64: 256, 128>}, {transform_indices = @transform_2, window_bounds = array<i64: 1, 128>}, {transform_indices = @transform_3, window_bounds = array<i64: 1, 128>}, {transform_indices = @transform_4, window_bounds = array<i64: 512, 128>}]} {
    %c0_i32 = arith.constant 0 : i32
    %0 = arith.cmpi eq, %arg2, %c0_i32 : i32
    %1 = arith.extui %0 : i1 to i32
    %c0_i32_0 = arith.constant 0 : i32
    %2 = arith.cmpi ne, %1, %c0_i32_0 : i32
    scf.if %2 {
      %cst_10 = arith.constant 0.000000e+00 : f32
      %12 = vector.broadcast %cst_10 : f32 to vector<512x128xf32>
      %c0_11 = arith.constant 0 : index
      %c0_12 = arith.constant 0 : index
      %13 = vector.load %arg7[%c0_11, %c0_12] : memref<512x128xf32, #tpu.memory_space<vmem>>, vector<512x128xf32>
      tpu.vector_store %arg7[%c0_11, %c0_12], %12 {strides = array<i32>} : memref<512x128xf32, #tpu.memory_space<vmem>>, vector<512x128xf32>,
    } else {
    }
    %c0 = arith.constant 0 : index
    %c0_1 = arith.constant 0 : index
    %3 = vector.load %arg7[%c0, %c0_1] : memref<512x128xf32, #tpu.memory_space<vmem>>, vector<512x128xf32>
    %c0_2 = arith.constant 0 : index
    %c0_3 = arith.constant 0 : index
    %4 = vector.load %arg3[%c0_2, %c0_3] : memref<512x256xbf16, #tpu.memory_space<vmem>>, vector<512x256xbf16>
    %c0_4 = arith.constant 0 : index
    %c0_5 = arith.constant 0 : index
    %5 = vector.load %arg4[%c0_4, %c0_5] : memref<256x128xbf16, #tpu.memory_space<vmem>>, vector<256x128xbf16>
    %cst = arith.constant dense<0.000000e+00> : vector<512x128xf32>
    %6 = tpu.matmul %4, %5, %cst {dimension_numbers = #tpu.dot_dimension_numbers<[1], [0], [0], [1], [0, 0, 1, 1], [], []>} : vector<512x256xbf16>, vector<256x128xbf16>, vector<512x128xf32> -> vector<512x128xf32>
    %7 = arith.addf %3, %6 : vector<512x128xf32>
    %c0_6 = arith.constant 0 : index
    %c0_7 = arith.constant 0 : index
    %8 = vector.load %arg7[%c0_6, %c0_7] : memref<512x128xf32, #tpu.memory_space<vmem>>, vector<512x128xf32>
    tpu.vector_store %arg7[%c0_6, %c0_7], %7 {strides = array<i32>} : memref<512x128xf32, #tpu.memory_space<vmem>>, vector<512x128xf32>,
    %c0_i32_8 = arith.constant 0 : i32
    %9 = arith.cmpi eq, %arg2, %c0_i32_8 : i32
    %10 = arith.extui %9 : i1 to i32
    %c0_i32_9 = arith.constant 0 : i32
    %11 = arith.cmpi ne, %10, %c0_i32_9 : i32
    scf.if %11 {
      %c0_10 = arith.constant 0 : index
      %c0_11 = arith.constant 0 : index
      %12 = vector.load %arg7[%c0_10, %c0_11] : memref<512x128xf32, #tpu.memory_space<vmem>>, vector<512x128xf32>
      %c0_12 = arith.constant 0 : index
      %c0_13 = arith.constant 0 : index
      %13 = vector.load %arg5[%c0_12, %c0_13] : memref<1x128xf32, #tpu.memory_space<vmem>>, vector<1x128xf32>
      %14 = vector.broadcast %13 : vector<1x128xf32> to vector<512x128xf32>
      %15 = arith.mulf %12, %14 : vector<512x128xf32>
      %c0_14 = arith.constant 0 : index
      %c0_15 = arith.constant 0 : index
      %16 = vector.load %arg6[%c0_14, %c0_15] : memref<1x128xf32, #tpu.memory_space<vmem>>, vector<1x128xf32>
      %17 = vector.broadcast %16 : vector<1x128xf32> to vector<512x128xf32>
      %18 = arith.addf %15, %17 : vector<512x128xf32>
      %cst_16 = arith.constant 0.000000e+00 : f32
      %19 = vector.broadcast %cst_16 : f32 to vector<512x128xf32>
      %20 = arith.maximumf %18, %19 : vector<512x128xf32>
      %c0_17 = arith.constant 0 : index
      %c0_18 = arith.constant 0 : index
      %21 = vector.load %arg7[%c0_17, %c0_18] : memref<512x128xf32, #tpu.memory_space<vmem>>, vector<512x128xf32>
      tpu.vector_store %arg7[%c0_17, %c0_18], %20 {strides = array<i32>} : memref<512x128xf32, #tpu.memory_space<vmem>>, vector<512x128xf32>,
    } else {
    }
    return
  }
  func.func @transform_0(%arg0: i32, %arg1: i32, %arg2: i32) -> (i32, i32) {
    %c0_i32 = arith.constant 0 : i32
    return %arg0, %arg2 : i32, i32
  }
  func.func @transform_1(%arg0: i32, %arg1: i32, %arg2: i32) -> (i32, i32) {
    %c0_i32 = arith.constant 0 : i32
    return %arg2, %arg1 : i32, i32
  }
  func.func @transform_2(%arg0: i32, %arg1: i32, %arg2: i32) -> (i32, i32) {
    %c0_i32 = arith.constant 0 : i32
    %c0_i32_0 = arith.constant 0 : i32
    return %c0_i32, %arg1 : i32, i32
  }
  func.func @transform_3(%arg0: i32, %arg1: i32, %arg2: i32) -> (i32, i32) {
    %c0_i32 = arith.constant 0 : i32
    %c0_i32_0 = arith.constant 0 : i32
    return %c0_i32, %arg1 : i32, i32
  }
  func.func @transform_4(%arg0: i32, %arg1: i32, %arg2: i32) -> (i32, i32) {
    %c0_i32 = arith.constant 0 : i32
    return %arg0, %arg1 : i32, i32
  }
}

</mosaic_0001>

<llo_original>
// kernel: tpu_custom_call.1
$region0: #{tpu_custom_call.1}
  #allocation0 [shape = 'u32[]', space=smem, size = 0x4, offset = 0x4, fixed_abs, tag = 'smem constant byte address 0x4 - core index']
  #allocation1 [shape = 'u32[72,128]{1,0:T(1,128)}', space=vmem, size = 0x9000, scoped, tag = 'internal scratch']
  %s0 = inlined_call_operand.hbm [shape: bf16[512,256], index: 0, kind: input, shape index: {}]
  %s1 = inlined_call_operand.hbm [shape: bf16[256,128], index: 1, kind: input, shape index: {}]
  %s2 = inlined_call_operand.vmem [shape: f32[1,128], index: 2, kind: input, shape index: {}]
  %s3 = inlined_call_operand.vmem [shape: f32[1,128], index: 3, kind: input, shape index: {}]
  %s4 = inlined_call_operand.hbm [shape: f32[512,128], index: 4, kind: output, shape index: {}]
  %s5 = sld [smem:[#allocation0]]
  $region42: #{tpu_custom_call.1} parent=0
    _
  %s7 = ssub.s32 1, %s5
  %s8 = scalar_select 0, %s7, %s5
  $region1: #{tpu_custom_call.1} parent=0
    #allocation2 [shape = 'u8[262144]{0}', space=vmem, size = 0x40000, scoped, tag = 'input window, operand 0, single buffered']
    #allocation3 [shape = 's32[1]{0}', space=sflag, size = 0x4, scoped, tag = 'scoped memory for tpu_custom_call.1']
    #allocation4 [shape = 's32[1]{0}', space=sflag, size = 0x4, scoped, tag = 'scoped memory for tpu_custom_call.1']
    #allocation5 [shape = 'u8[65536]{0}', space=vmem, size = 0x10000, scoped, tag = 'input window, operand 1, single buffered']
    #allocation6 [shape = 's32[1]{0}', space=sflag, size = 0x4, scoped, tag = 'scoped memory for tpu_custom_call.1']
    #allocation7 [shape = 'u8[262144]{0}', space=vmem, size = 0x40000, scoped, tag = 'output window, operand 0, single buffered']
    %9 = vsyncpa [#allocation3], 0
    %10 = vsyncpa [#allocation6], 0
    %11 = vsyncpa [#allocation4], 0
    // Predicated region
    $region2: #{tpu_custom_call.1} parent=1 // pred_check
      _
    $region3: #{tpu_custom_call.1} parent=1 // pred_check_branch
      %13 = sbr.rel (0) target = $region5
    $region4: #{tpu_custom_call.1} parent=1 // pred_region
      %15 = vsyncadd [#allocation3], 0
      %s16 = sshll.u32 %s0, 4
      %s17 = int_to_ptr.hbm [resolvable:$true] %s16
      %s18 = sshll.u32 [#allocation2], 4
      %s19 = int_to_ptr.vmem [resolvable:$true] %s18
      %24 = dma.hbm_to_vmem [thread:$0]  %s17, 8192, %s19, [#allocation3], 128, 128, 8
    $region5: #{tpu_custom_call.1} parent=1 // pred_fallthru
      _
    // Predicated region
    $region6: #{tpu_custom_call.1} parent=1 // pred_check
      _
    $region7: #{tpu_custom_call.1} parent=1 // pred_check_branch
      %26 = sbr.rel (0) target = $region9
    $region8: #{tpu_custom_call.1} parent=1 // pred_region
      %28 = vsyncadd [#allocation6], 0
      %s29 = sshll.u32 %s1, 4
      %s30 = int_to_ptr.hbm [resolvable:$true] %s29
      %s31 = sshll.u32 [#allocation5], 4
      %s32 = int_to_ptr.vmem [resolvable:$true] %s31
      %37 = dma.hbm_to_vmem [thread:$0]  %s30, 2048, %s32, [#allocation6], 64, 64, 4
    $region9: #{tpu_custom_call.1} parent=1 // pred_fallthru
      _
    // Predicated region
    $region10: #{tpu_custom_call.1} parent=1 // pred_check
      _
    $region11: #{tpu_custom_call.1} parent=1 // pred_check_branch
      %39 = sbr.rel (0) target = $region13
    $region12: #{tpu_custom_call.1} parent=1 // pred_region
      _
    $region13: #{tpu_custom_call.1} parent=1 // pred_fallthru
      _
    // Predicated region
    $region14: #{tpu_custom_call.1} parent=1 // pred_check
      _
    $region15: #{tpu_custom_call.1} parent=1 // pred_check_branch
      %41 = sbr.rel (0) target = $region17
    $region16: #{tpu_custom_call.1} parent=1 // pred_region
      _
    $region17: #{tpu_custom_call.1} parent=1 // pred_fallthru
      _
    // Predicated region
    $region18: #{tpu_custom_call.1} parent=1 // pred_check
      _
    $region19: #{tpu_custom_call.1} parent=1 // pred_check_branch
      %43 = sbr.rel (0) target = $region21
    $region20: #{tpu_custom_call.1} parent=1 // pred_region
      %45 = dma.done [#allocation3], 8192
    $region21: #{tpu_custom_call.1} parent=1 // pred_fallthru
      _
    // Predicated region
    $region22: #{tpu_custom_call.1} parent=1 // pred_check
      _
    $region23: #{tpu_custom_call.1} parent=1 // pred_check_branch
      %47 = sbr.rel (0) target = $region25
    $region24: #{tpu_custom_call.1} parent=1 // pred_region
      %49 = dma.done [#allocation6], 2048
    $region25: #{tpu_custom_call.1} parent=1 // pred_fallthru
      _
    %p50 = scmp.eq.s32.totalorder 0, 0
    // Predicated region
    $region26: #{tpu_custom_call.1} parent=1 // pred_check
      %p51 = pneg %p50
    $region27: #{tpu_custom_call.1} parent=1 // pred_check_branch
      %53 = sbr.rel (%p51) target = $region29
    $region28: #{tpu_custom_call.1} parent=1 // pred_region
      %54 = vst [vmem:[#allocation7] sm:$0xff] 0.0
      %55 = vst [vmem:[#allocation7 + $0x8] sm:$0xff] 0.0
      %56 = vst [vmem:[#allocation7 + $0x10] sm:$0xff] 0.0
      %57 = vst [vmem:[#allocation7 + $0x18] sm:$0xff] 0.0
      %58 = vst [vmem:[#allocation7 + $0x20] sm:$0xff] 0.0
      %59 = vst [vmem:[#allocation7 + $0x28] sm:$0xff] 0.0
      %60 = vst [vmem:[#allocation7 + $0x30] sm:$0xff] 0.0
      %61 = vst [vmem:[#allocation7 + $0x38] sm:$0xff] 0.0
      %62 = vst [vmem:[#allocation7 + $0x40] sm:$0xff] 0.0
      %63 = vst [vmem:[#allocation7 + $0x48] sm:$0xff] 0.0
      %64 = vst [vmem:[#allocation7 + $0x50] sm:$0xff] 0.0
      %65 = vst [vmem:[#allocation7 + $0x58] sm:$0xff] 0.0
      %66 = vst [vmem:[#allocation7 + $0x60] sm:$0xff] 0.0
      %67 = vst [vmem:[#allocation7 + $0x68] sm:$0xff] 0.0
      %68 = vst [vmem:[#allocation7 + $0x70] sm:$0xff] 0.0
      %69 = vst [vmem:[#allocation7 + $0x78] sm:$0xff] 0.0
      %70 = vst [vmem:[#allocation7 + $0x80] sm:$0xff] 0.0
      %71 = vst [vmem:[#allocation7 + $0x88] sm:$0xff] 0.0
      %72 = vst [vmem:[#allocation7 + $0x90] sm:$0xff] 0.0
      %73 = vst [vmem:[#allocation7 + $0x98] sm:$0xff] 0.0
      %74 = vst [vmem:[#allocation7 + $0xa0] sm:$0xff] 0.0
      %75 = vst [vmem:[#allocation7 + $0xa8] sm:$0xff] 0.0
      %76 = vst [vmem:[#allocation7 + $0xb0] sm:$0xff] 0.0
      %77 = vst [vmem:[#allocation7 + $0xb8] sm:$0xff] 0.0
      %78 = vst [vmem:[#allocation7 + $0xc0] sm:$0xff] 0.0
      %79 = vst [vmem:[#allocation7 + $0xc8] sm:$0xff] 0.0
      %80 = vst [vmem:[#allocation7 + $0xd0] sm:$0xff] 0.0
      %81 = vst [vmem:[#allocation7 + $0xd8] sm:$0xff] 0.0
      %82 = vst [vmem:[#allocation7 + $0xe0] sm:$0xff] 0.0
      %83 = vst [vmem:[#allocation7 + $0xe8] sm:$0xff] 0.0
      %84 = vst [vmem:[#allocation7 + $0xf0] sm:$0xff] 0.0
      %85 = vst [vmem:[#allocation7 + $0xf8] sm:$0xff] 0.0
      %86 = vst [vmem:[#allocation7 + $0x100] sm:$0xff] 0.0
      %87 = vst [vmem:[#allocation7 + $0x108] sm:$0xff] 0.0
      %88 = vst [vmem:[#allocation7 + $0x110] sm:$0xff] 0.0
      %89 = vst [vmem:[#allocation7 + $0x118] sm:$0xff] 0.0
      %90 = vst [vmem:[#allocation7 + $0x120] sm:$0xff] 0.0
      %91 = vst [vmem:[#allocation7 + $0x128] sm:$0xff] 0.0
      %92 = vst [vmem:[#allocation7 + $0x130] sm:$0xff] 0.0
      %93 = vst [vmem:[#allocation7 + $0x138] sm:$0xff] 0.0
      %94 = vst [vmem:[#allocation7 + $0x140] sm:$0xff] 0.0
      %95 = vst [vmem:[#allocation7 + $0x148] sm:$0xff] 0.0
      %96 = vst [vmem:[#allocation7 + $0x150] sm:$0xff] 0.0
      %97 = vst [vmem:[#allocation7 + $0x158] sm:$0xff] 0.0
      %98 = vst [vmem:[#allocation7 + $0x160] sm:$0xff] 0.0
      %99 = vst [vmem:[#allocation7 + $0x168] sm:$0xff] 0.0
      %100 = vst [vmem:[#allocation7 + $0x170] sm:$0xff] 0.0
      %101 = vst [vmem:[#allocation7 + $0x178] sm:$0xff] 0.0
      %102 = vst [vmem:[#allocation7 + $0x180] sm:$0xff] 0.0
      %103 = vst [vmem:[#allocation7 + $0x188] sm:$0xff] 0.0
      %104 = vst [vmem:[#allocation7 + $0x190] sm:$0xff] 0.0
      %105 = vst [vmem:[#allocation7 + $0x198] sm:$0xff] 0.0
      %106 = vst [vmem:[#allocation7 + $0x1a0] sm:$0xff] 0.0
      %107 = vst [vmem:[#allocation7 + $0x1a8] sm:$0xff] 0.0
      %108 = vst [vmem:[#allocation7 + $0x1b0] sm:$0xff] 0.0
      %109 = vst [vmem:[#allocation7 + $0x1b8] sm:$0xff] 0.0
      %110 = vst [vmem:[#allocation7 + $0x1c0] sm:$0xff] 0.0
      %111 = vst [vmem:[#allocation7 + $0x1c8] sm:$0xff] 0.0
      %112 = vst [vmem:[#allocation7 + $0x1d0] sm:$0xff] 0.0
      %113 = vst [vmem:[#allocation7 + $0x1d8] sm:$0xff] 0.0
      %114 = vst [vmem:[#allocation7 + $0x1e0] sm:$0xff] 0.0
      %115 = vst [vmem:[#allocation7 + $0x1e8] sm:$0xff] 0.0
      %116 = vst [vmem:[#allocation7 + $0x1f0] sm:$0xff] 0.0
      %117 = vst [vmem:[#allocation7 + $0x1f8] sm:$0xff] 0.0
    $region29: #{tpu_custom_call.1} parent=1 // pred_fallthru
      _
    %v118 = vld [vmem:[#allocation7] sm:$0xff]
    %v119 = vld [vmem:[#allocation7 + $0x8] sm:$0xff]
    %v120 = vld [vmem:[#allocation7 + $0x10] sm:$0xff]
    %v121 = vld [vmem:[#allocation7 + $0x18] sm:$0xff]
    %v122 = vld [vmem:[#allocation7 + $0x20] sm:$0xff]
    %v123 = vld [vmem:[#allocation7 + $0x28] sm:$0xff]
    %v124 = vld [vmem:[#allocation7 + $0x30] sm:$0xff]
    %v125 = vld [vmem:[#allocation7 + $0x38] sm:$0xff]
    %v126 = vld [vmem:[#allocation7 + $0x40] sm:$0xff]
    %v127 = vld [vmem:[#allocation7 + $0x48] sm:$0xff]
    %v128 = vld [vmem:[#allocation7 + $0x50] sm:$0xff]
    %v129 = vld [vmem:[#allocation7 + $0x58] sm:$0xff]
    %v130 = vld [vmem:[#allocation7 + $0x60] sm:$0xff]
    %v131 = vld [vmem:[#allocation7 + $0x68] sm:$0xff]
    %v132 = vld [vmem:[#allocation7 + $0x70] sm:$0xff]
    %v133 = vld [vmem:[#allocation7 + $0x78] sm:$0xff]
    %v134 = vld [vmem:[#allocation7 + $0x80] sm:$0xff]
    %v135 = vld [vmem:[#allocation7 + $0x88] sm:$0xff]
    %v136 = vld [vmem:[#allocation7 + $0x90] sm:$0xff]
    %v137 = vld [vmem:[#allocation7 + $0x98] sm:$0xff]
    %v138 = vld [vmem:[#allocation7 + $0xa0] sm:$0xff]
    %v139 = vld [vmem:[#allocation7 + $0xa8] sm:$0xff]
    %v140 = vld [vmem:[#allocation7 + $0xb0] sm:$0xff]
    %v141 = vld [vmem:[#allocation7 + $0xb8] sm:$0xff]
    %v142 = vld [vmem:[#allocation7 + $0xc0] sm:$0xff]
    %v143 = vld [vmem:[#allocation7 + $0xc8] sm:$0xff]
    %v144 = vld [vmem:[#allocation7 + $0xd0] sm:$0xff]
    %v145 = vld [vmem:[#allocation7 + $0xd8] sm:$0xff]
    %v146 = vld [vmem:[#allocation7 + $0xe0] sm:$0xff]
    %v147 = vld [vmem:[#allocation7 + $0xe8] sm:$0xff]
    %v148 = vld [vmem:[#allocation7 + $0xf0] sm:$0xff]
    %v149 = vld [vmem:[#allocation7 + $0xf8] sm:$0xff]
    %v150 = vld [vmem:[#allocation7 + $0x100] sm:$0xff]
    %v151 = vld [vmem:[#allocation7 + $0x108] sm:$0xff]
    %v152 = vld [vmem:[#allocation7 + $0x110] sm:$0xff]
    %v153 = vld [vmem:[#allocation7 + $0x118] sm:$0xff]
    %v154 = vld [vmem:[#allocation7 + $0x120] sm:$0xff]
    %v155 = vld [vmem:[#allocation7 + $0x128] sm:$0xff]
    %v156 = vld [vmem:[#allocation7 + $0x130] sm:$0xff]
    %v157 = vld [vmem:[#allocation7 + $0x138] sm:$0xff]
    %v158 = vld [vmem:[#allocation7 + $0x140] sm:$0xff]
    %v159 = vld [vmem:[#allocation7 + $0x148] sm:$0xff]
    %v160 = vld [vmem:[#allocation7 + $0x150] sm:$0xff]
    %v161 = vld [vmem:[#allocation7 + $0x158] sm:$0xff]
    %v162 = vld [vmem:[#allocation7 + $0x160] sm:$0xff]
    %v163 = vld [vmem:[#allocation7 + $0x168] sm:$0xff]
    %v164 = vld [vmem:[#allocation7 + $0x170] sm:$0xff]
    %v165 = vld [vmem:[#allocation7 + $0x178] sm:$0xff]
    %v166 = vld [vmem:[#allocation7 + $0x180] sm:$0xff]
    %v167 = vld [vmem:[#allocation7 + $0x188] sm:$0xff]
    %v168 = vld [vmem:[#allocation7 + $0x190] sm:$0xff]
    %v169 = vld [vmem:[#allocation7 + $0x198] sm:$0xff]
    %v170 = vld [vmem:[#allocation7 + $0x1a0] sm:$0xff]
    %v171 = vld [vmem:[#allocation7 + $0x1a8] sm:$0xff]
    %v172 = vld [vmem:[#allocation7 + $0x1b0] sm:$0xff]
    %v173 = vld [vmem:[#allocation7 + $0x1b8] sm:$0xff]
    %v174 = vld [vmem:[#allocation7 + $0x1c0] sm:$0xff]
    %v175 = vld [vmem:[#allocation7 + $0x1c8] sm:$0xff]
    %v176 = vld [vmem:[#allocation7 + $0x1d0] sm:$0xff]
    %v177 = vld [vmem:[#allocation7 + $0x1d8] sm:$0xff]
    %v178 = vld [vmem:[#allocation7 + $0x1e0] sm:$0xff]
    %v179 = vld [vmem:[#allocation7 + $0x1e8] sm:$0xff]
    %v180 = vld [vmem:[#allocation7 + $0x1f0] sm:$0xff]
    %v181 = vld [vmem:[#allocation7 + $0x1f8] sm:$0xff]
    %v182 = vld [vmem:[#allocation2] sm:$0xff]
    %v183 = vld [vmem:[#allocation2 + $0x8] sm:$0xff]
    %v184 = vld [vmem:[#allocation2 + $0x10] sm:$0xff]
    %v185 = vld [vmem:[#allocation2 + $0x18] sm:$0xff]
    %v186 = vld [vmem:[#allocation2 + $0x20] sm:$0xff]
    %v187 = vld [vmem:[#allocation2 + $0x28] sm:$0xff]
    %v188 = vld [vmem:[#allocation2 + $0x30] sm:$0xff]
    %v189 = vld [vmem:[#allocation2 + $0x38] sm:$0xff]
    %v190 = vld [vmem:[#allocation2 + $0x40] sm:$0xff]
    %v191 = vld [vmem:[#allocation2 + $0x48] sm:$0xff]
    %v192 = vld [vmem:[#allocation2 + $0x50] sm:$0xff]
    %v193 = vld [vmem:[#allocation2 + $0x58] sm:$0xff]
    %v194 = vld [vmem:[#allocation2 + $0x60] sm:$0xff]
    %v195 = vld [vmem:[#allocation2 + $0x68] sm:$0xff]
    %v196 = vld [vmem:[#allocation2 + $0x70] sm:$0xff]
    %v197 = vld [vmem:[#allocation2 + $0x78] sm:$0xff]
    %v198 = vld [vmem:[#allocation2 + $0x80] sm:$0xff]
    %v199 = vld [vmem:[#allocation2 + $0x88] sm:$0xff]
    %v200 = vld [vmem:[#allocation2 + $0x90] sm:$0xff]
    %v201 = vld [vmem:[#allocation2 + $0x98] sm:$0xff]
    %v202 = vld [vmem:[#allocation2 + $0xa0] sm:$0xff]
    %v203 = vld [vmem:[#allocation2 + $0xa8] sm:$0xff]
    %v204 = vld [vmem:[#allocation2 + $0xb0] sm:$0xff]
    %v205 = vld [vmem:[#allocation2 + $0xb8] sm:$0xff]
    %v206 = vld [vmem:[#allocation2 + $0xc0] sm:$0xff]
    %v207 = vld [vmem:[#allocation2 + $0xc8] sm:$0xff]
    %v208 = vld [vmem:[#allocation2 + $0xd0] sm:$0xff]
    %v209 = vld [vmem:[#allocation2 + $0xd8] sm:$0xff]
    %v210 = vld [vmem:[#allocation2 + $0xe0] sm:$0xff]
    %v211 = vld [vmem:[#allocation2 + $0xe8] sm:$0xff]
    %v212 = vld [vmem:[#allocation2 + $0xf0] sm:$0xff]
    %v213 = vld [vmem:[#allocation2 + $0xf8] sm:$0xff]
    %v214 = vld [vmem:[#allocation2 + $0x100] sm:$0xff]
    %v215 = vld [vmem:[#allocation2 + $0x108] sm:$0xff]
    %v216 = vld [vmem:[#allocation2 + $0x110] sm:$0xff]
    %v217 = vld [vmem:[#allocation2 + $0x118] sm:$0xff]
    %v218 = vld [vmem:[#allocation2 + $0x120] sm:$0xff]
    %v219 = vld [vmem:[#allocation2 + $0x128] sm:$0xff]
    %v220 = vld [vmem:[#allocation2 + $0x130] sm:$0xff]
    %v221 = vld [vmem:[#allocation2 + $0x138] sm:$0xff]
    %v222 = vld [vmem:[#allocation2 + $0x140] sm:$0xff]
    %v223 = vld [vmem:[#allocation2 + $0x148] sm:$0xff]
    %v224 = vld [vmem:[#allocation2 + $0x150] sm:$0xff]
    %v225 = vld [vmem:[#allocation2 + $0x158] sm:$0xff]
    %v226 = vld [vmem:[#allocation2 + $0x160] sm:$0xff]
    %v227 = vld [vmem:[#allocation2 + $0x168] sm:$0xff]
    %v228 = vld [vmem:[#allocation2 + $0x170] sm:$0xff]
    %v229 = vld [vmem:[#allocation2 + $0x178] sm:$0xff]
    %v230 = vld [vmem:[#allocation2 + $0x180] sm:$0xff]
    %v231 = vld [vmem:[#allocation2 + $0x188] sm:$0xff]
    %v232 = vld [vmem:[#allocation2 + $0x190] sm:$0xff]
    %v233 = vld [vmem:[#allocation2 + $0x198] sm:$0xff]
    %v234 = vld [vmem:[#allocation2 + $0x1a0] sm:$0xff]
    %v235 = vld [vmem:[#allocation2 + $0x1a8] sm:$0xff]
    %v236 = vld [vmem:[#allocation2 + $0x1b0] sm:$0xff]
    %v237 = vld [vmem:[#allocation2 + $0x1b8] sm:$0xff]
    %v238 = vld [vmem:[#allocation2 + $0x1c0] sm:$0xff]
    %v239 = vld [vmem:[#allocation2 + $0x1c8] sm:$0xff]
    %v240 = vld [vmem:[#allocation2 + $0x1d0] sm:$0xff]
    %v241 = vld [vmem:[#allocation2 + $0x1d8] sm:$0xff]
    %v242 = vld [vmem:[#allocation2 + $0x1e0] sm:$0xff]
    %v243 = vld [vmem:[#allocation2 + $0x1e8] sm:$0xff]
    %v244 = vld [vmem:[#allocation2 + $0x1f0] sm:$0xff]
    %v245 = vld [vmem:[#allocation2 + $0x1f8] sm:$0xff]
    %v246 = vld [vmem:[#allocation5] sm:$0xf]
    %v247 = vld [vmem:[#allocation5 + $0x4] sm:$0xf]
    %v248 = vld [vmem:[#allocation5 + $0x8] sm:$0xf]
    %v249 = vld [vmem:[#allocation5 + $0xc] sm:$0xf]
    %v250 = vld [vmem:[#allocation5 + $0x10] sm:$0xf]
    %v251 = vld [vmem:[#allocation5 + $0x14] sm:$0xf]
    %v252 = vld [vmem:[#allocation5 + $0x18] sm:$0xf]
    %v253 = vld [vmem:[#allocation5 + $0x1c] sm:$0xf]
    %v254 = vld [vmem:[#allocation5 + $0x20] sm:$0xf]
    %v255 = vld [vmem:[#allocation5 + $0x24] sm:$0xf]
    %v256 = vld [vmem:[#allocation5 + $0x28] sm:$0xf]
    %v257 = vld [vmem:[#allocation5 + $0x2c] sm:$0xf]
    %v258 = vld [vmem:[#allocation5 + $0x30] sm:$0xf]
    %v259 = vld [vmem:[#allocation5 + $0x34] sm:$0xf]
    %v260 = vld [vmem:[#allocation5 + $0x38] sm:$0xf]
    %v261 = vld [vmem:[#allocation5 + $0x3c] sm:$0xf]
    %v262 = vld [vmem:[#allocation5 + $0x40] sm:$0xf]
    %v263 = vld [vmem:[#allocation5 + $0x44] sm:$0xf]
    %v264 = vld [vmem:[#allocation5 + $0x48] sm:$0xf]
    %v265 = vld [vmem:[#allocation5 + $0x4c] sm:$0xf]
    %v266 = vld [vmem:[#allocation5 + $0x50] sm:$0xf]
    %v267 = vld [vmem:[#allocation5 + $0x54] sm:$0xf]
    %v268 = vld [vmem:[#allocation5 + $0x58] sm:$0xf]
    %v269 = vld [vmem:[#allocation5 + $0x5c] sm:$0xf]
    %v270 = vld [vmem:[#allocation5 + $0x60] sm:$0xf]
    %v271 = vld [vmem:[#allocation5 + $0x64] sm:$0xf]
    %v272 = vld [vmem:[#allocation5 + $0x68] sm:$0xf]
    %v273 = vld [vmem:[#allocation5 + $0x6c] sm:$0xf]
    %v274 = vld [vmem:[#allocation5 + $0x70] sm:$0xf]
    %v275 = vld [vmem:[#allocation5 + $0x74] sm:$0xf]
    %v276 = vld [vmem:[#allocation5 + $0x78] sm:$0xf]
    %v277 = vld [vmem:[#allocation5 + $0x7c] sm:$0xf]
    %v342 = vunpack.c.l.b16 %v182
    %v343 = vunpack.c.h.b16 %v182
    %v344 = vunpack.c.l.b16 %v183
    %v345 = vunpack.c.h.b16 %v183
    %v346 = vunpack.c.l.b16 %v184
    %v347 = vunpack.c.h.b16 %v184
    %v348 = vunpack.c.l.b16 %v185
    %v349 = vunpack.c.h.b16 %v185
    %v350 = vunpack.c.l.b16 %v186
    %v351 = vunpack.c.h.b16 %v186
    %v352 = vunpack.c.l.b16 %v187
    %v353 = vunpack.c.h.b16 %v187
    %v354 = vunpack.c.l.b16 %v188
    %v355 = vunpack.c.h.b16 %v188
    %v356 = vunpack.c.l.b16 %v189
    %v357 = vunpack.c.h.b16 %v189
    %v358 = vunpack.c.l.b16 %v190
    %v359 = vunpack.c.h.b16 %v190
    %v360 = vunpack.c.l.b16 %v191
    %v361 = vunpack.c.h.b16 %v191
    %v362 = vunpack.c.l.b16 %v192
    %v363 = vunpack.c.h.b16 %v192
    %v364 = vunpack.c.l.b16 %v193
    %v365 = vunpack.c.h.b16 %v193
    %v366 = vunpack.c.l.b16 %v194
    %v367 = vunpack.c.h.b16 %v194
    %v368 = vunpack.c.l.b16 %v195
    %v369 = vunpack.c.h.b16 %v195
    %v370 = vunpack.c.l.b16 %v196
    %v371 = vunpack.c.h.b16 %v196
    %v372 = vunpack.c.l.b16 %v197
    %v373 = vunpack.c.h.b16 %v197
    %v374 = vunpack.c.l.b16 %v198
    %v375 = vunpack.c.h.b16 %v198
    %v376 = vunpack.c.l.b16 %v199
    %v377 = vunpack.c.h.b16 %v199
    %v378 = vunpack.c.l.b16 %v200
    %v379 = vunpack.c.h.b16 %v200
    %v380 = vunpack.c.l.b16 %v201
    %v381 = vunpack.c.h.b16 %v201
    %v382 = vunpack.c.l.b16 %v202
    %v383 = vunpack.c.h.b16 %v202
    %v384 = vunpack.c.l.b16 %v203
    %v385 = vunpack.c.h.b16 %v203
    %v386 = vunpack.c.l.b16 %v204
    %v387 = vunpack.c.h.b16 %v204
    %v388 = vunpack.c.l.b16 %v205
    %v389 = vunpack.c.h.b16 %v205
    %v390 = vunpack.c.l.b16 %v206
    %v391 = vunpack.c.h.b16 %v206
    %v392 = vunpack.c.l.b16 %v207
    %v393 = vunpack.c.h.b16 %v207
    %v394 = vunpack.c.l.b16 %v208
    %v395 = vunpack.c.h.b16 %v208
    %v396 = vunpack.c.l.b16 %v209
    %v397 = vunpack.c.h.b16 %v209
    %v398 = vunpack.c.l.b16 %v210
    %v399 = vunpack.c.h.b16 %v210
    %v400 = vunpack.c.l.b16 %v211
    %v401 = vunpack.c.h.b16 %v211
    %v402 = vunpack.c.l.b16 %v212
    %v403 = vunpack.c.h.b16 %v212
    %v404 = vunpack.c.l.b16 %v213
    %v405 = vunpack.c.h.b16 %v213
    %v406 = vunpack.c.l.b16 %v214
    %v407 = vunpack.c.h.b16 %v214
    %v408 = vunpack.c.l.b16 %v215
    %v409 = vunpack.c.h.b16 %v215
    %v410 = vunpack.c.l.b16 %v216
    %v411 = vunpack.c.h.b16 %v216
    %v412 = vunpack.c.l.b16 %v217
    %v413 = vunpack.c.h.b16 %v217
    %v414 = vunpack.c.l.b16 %v218
    %v415 = vunpack.c.h.b16 %v218
    %v416 = vunpack.c.l.b16 %v219
    %v417 = vunpack.c.h.b16 %v219
    %v418 = vunpack.c.l.b16 %v220
    %v419 = vunpack.c.h.b16 %v220
    %v420 = vunpack.c.l.b16 %v221
    %v421 = vunpack.c.h.b16 %v221
    %v422 = vunpack.c.l.b16 %v222
    %v423 = vunpack.c.h.b16 %v222
    %v424 = vunpack.c.l.b16 %v223
    %v425 = vunpack.c.h.b16 %v223
    %v426 = vunpack.c.l.b16 %v224
    %v427 = vunpack.c.h.b16 %v224
    %v428 = vunpack.c.l.b16 %v225
    %v429 = vunpack.c.h.b16 %v225
    %v430 = vunpack.c.l.b16 %v226
    %v431 = vunpack.c.h.b16 %v226
    %v432 = vunpack.c.l.b16 %v227
    %v433 = vunpack.c.h.b16 %v227
    %v434 = vunpack.c.l.b16 %v228
    %v435 = vunpack.c.h.b16 %v228
    %v436 = vunpack.c.l.b16 %v229
    %v437 = vunpack.c.h.b16 %v229
    %v438 = vunpack.c.l.b16 %v230
    %v439 = vunpack.c.h.b16 %v230
    %v440 = vunpack.c.l.b16 %v231
    %v441 = vunpack.c.h.b16 %v231
    %v442 = vunpack.c.l.b16 %v232
    %v443 = vunpack.c.h.b16 %v232
    %v444 = vunpack.c.l.b16 %v233
    %v445 = vunpack.c.h.b16 %v233
    %v446 = vunpack.c.l.b16 %v234
    %v447 = vunpack.c.h.b16 %v234
    %v448 = vunpack.c.l.b16 %v235
    %v449 = vunpack.c.h.b16 %v235
    %v450 = vunpack.c.l.b16 %v236
    %v451 = vunpack.c.h.b16 %v236
    %v452 = vunpack.c.l.b16 %v237
    %v453 = vunpack.c.h.b16 %v237
    %v454 = vunpack.c.l.b16 %v238
    %v455 = vunpack.c.h.b16 %v238
    %v456 = vunpack.c.l.b16 %v239
    %v457 = vunpack.c.h.b16 %v239
    %v458 = vunpack.c.l.b16 %v240
    %v459 = vunpack.c.h.b16 %v240
    %v460 = vunpack.c.l.b16 %v241
    %v461 = vunpack.c.h.b16 %v241
    %v462 = vunpack.c.l.b16 %v242
    %v463 = vunpack.c.h.b16 %v242
    %v464 = vunpack.c.l.b16 %v243
    %v465 = vunpack.c.h.b16 %v243
    %v466 = vunpack.c.l.b16 %v244
    %v467 = vunpack.c.h.b16 %v244
    %v468 = vunpack.c.l.b16 %v245
    %v469 = vunpack.c.h.b16 %v245
    %v470 = vpack.c.b16 %v344, %v342
    %v471 = vpack.c.b16 %v345, %v343
    %v472 = vpack.c.b16 %v348, %v346
    %v473 = vpack.c.b16 %v349, %v347
    %v474 = vpack.c.b16 %v352, %v350
    %v475 = vpack.c.b16 %v353, %v351
    %v476 = vpack.c.b16 %v356, %v354
    %v477 = vpack.c.b16 %v357, %v355
    %v478 = vpack.c.b16 %v360, %v358
    %v479 = vpack.c.b16 %v361, %v359
    %v480 = vpack.c.b16 %v364, %v362
    %v481 = vpack.c.b16 %v365, %v363
    %v482 = vpack.c.b16 %v368, %v366
    %v483 = vpack.c.b16 %v369, %v367
    %v484 = vpack.c.b16 %v372, %v370
    %v485 = vpack.c.b16 %v373, %v371
    %v486 = vpack.c.b16 %v376, %v374
    %v487 = vpack.c.b16 %v377, %v375
    %v488 = vpack.c.b16 %v380, %v378
    %v489 = vpack.c.b16 %v381, %v379
    %v490 = vpack.c.b16 %v384, %v382
    %v491 = vpack.c.b16 %v385, %v383
    %v492 = vpack.c.b16 %v388, %v386
    %v493 = vpack.c.b16 %v389, %v387
    %v494 = vpack.c.b16 %v392, %v390
    %v495 = vpack.c.b16 %v393, %v391
    %v496 = vpack.c.b16 %v396, %v394
    %v497 = vpack.c.b16 %v397, %v395
    %v498 = vpack.c.b16 %v400, %v398
    %v499 = vpack.c.b16 %v401, %v399
    %v500 = vpack.c.b16 %v404, %v402
    %v501 = vpack.c.b16 %v405, %v403
    %v502 = vpack.c.b16 %v408, %v406
    %v503 = vpack.c.b16 %v409, %v407
    %v504 = vpack.c.b16 %v412, %v410
    %v505 = vpack.c.b16 %v413, %v411
    %v506 = vpack.c.b16 %v416, %v414
    %v507 = vpack.c.b16 %v417, %v415
    %v508 = vpack.c.b16 %v420, %v418
    %v509 = vpack.c.b16 %v421, %v419
    %v510 = vpack.c.b16 %v424, %v422
    %v511 = vpack.c.b16 %v425, %v423
    %v512 = vpack.c.b16 %v428, %v426
    %v513 = vpack.c.b16 %v429, %v427
    %v514 = vpack.c.b16 %v432, %v430
    %v515 = vpack.c.b16 %v433, %v431
    %v516 = vpack.c.b16 %v436, %v434
    %v517 = vpack.c.b16 %v437, %v435
    %v518 = vpack.c.b16 %v440, %v438
    %v519 = vpack.c.b16 %v441, %v439
    %v520 = vpack.c.b16 %v444, %v442
    %v521 = vpack.c.b16 %v445, %v443
    %v522 = vpack.c.b16 %v448, %v446
    %v523 = vpack.c.b16 %v449, %v447
    %v524 = vpack.c.b16 %v452, %v450
    %v525 = vpack.c.b16 %v453, %v451
    %v526 = vpack.c.b16 %v456, %v454
    %v527 = vpack.c.b16 %v457, %v455
    %v528 = vpack.c.b16 %v460, %v458
    %v529 = vpack.c.b16 %v461, %v459
    %v530 = vpack.c.b16 %v464, %v462
    %v531 = vpack.c.b16 %v465, %v463
    %v532 = vpack.c.b16 %v468, %v466
    %v533 = vpack.c.b16 %v469, %v467
    %v630 = vunpack.c.l.b16 %v246
    %v631 = vunpack.c.l.b16 %v247
    %v632 = vunpack.c.l.b16 %v248
    %v633 = vunpack.c.l.b16 %v249
    %v634 = vunpack.c.l.b16 %v250
    %v635 = vunpack.c.l.b16 %v251
    %v636 = vunpack.c.l.b16 %v252
    %v637 = vunpack.c.l.b16 %v253
    %v638 = vunpack.c.l.b16 %v254
    %v639 = vunpack.c.l.b16 %v255
    %v640 = vunpack.c.l.b16 %v256
    %v641 = vunpack.c.l.b16 %v257
    %v642 = vunpack.c.l.b16 %v258
    %v643 = vunpack.c.l.b16 %v259
    %v644 = vunpack.c.l.b16 %v260
    %v645 = vunpack.c.l.b16 %v261
    %v646 = vunpack.c.l.b16 %v262
    %v647 = vunpack.c.l.b16 %v263
    %v648 = vunpack.c.l.b16 %v264
    %v649 = vunpack.c.l.b16 %v265
    %v650 = vunpack.c.l.b16 %v266
    %v651 = vunpack.c.l.b16 %v267
    %v652 = vunpack.c.l.b16 %v268
    %v653 = vunpack.c.l.b16 %v269
    %v654 = vunpack.c.l.b16 %v270
    %v655 = vunpack.c.l.b16 %v271
    %v656 = vunpack.c.l.b16 %v272
    %v657 = vunpack.c.l.b16 %v273
    %v658 = vunpack.c.l.b16 %v274
    %v659 = vunpack.c.l.b16 %v275
    %v660 = vunpack.c.l.b16 %v276
    %v661 = vunpack.c.l.b16 %v277
    %v662 = vpack.c.b16 %v631, %v630
    %v663 = vpack.c.b16 %v633, %v632
    %v664 = vpack.c.b16 %v635, %v634
    %v665 = vpack.c.b16 %v637, %v636
    %v666 = vpack.c.b16 %v639, %v638
    %v667 = vpack.c.b16 %v641, %v640
    %v668 = vpack.c.b16 %v643, %v642
    %v669 = vpack.c.b16 %v645, %v644
    %v670 = vpack.c.b16 %v647, %v646
    %v671 = vpack.c.b16 %v649, %v648
    %v672 = vpack.c.b16 %v651, %v650
    %v673 = vpack.c.b16 %v653, %v652
    %v674 = vpack.c.b16 %v655, %v654
    %v675 = vpack.c.b16 %v657, %v656
    %v676 = vpack.c.b16 %v659, %v658
    %v677 = vpack.c.b16 %v661, %v660
    %694 = vmatpush.bf16.msra.mxu0 %v669
    %695 = vmatpush.bf16.msra.mxu0 %v668
    %696 = vmatpush.bf16.msra.mxu0 %v667
    %697 = vmatpush.bf16.msra.mxu0 %v666
    %698 = vmatpush.bf16.msra.mxu0 %v665
    %699 = vmatpush.bf16.msra.mxu0 %v664
    %700 = vmatpush.bf16.msra.mxu0 %v663
    %701 = vmatpush.bf16.msra.mxu0 %v662
    %702 = vmatmul.bf16.gmra.mxu0 %v470
    %v703 = vpop.f32.mrf.mxu0
    %v704 = vadd.f32 0.0, %v703
    %v705 = vpop.f32.mrf.mxu0
    %v706 = vadd.f32 0.0, %v705
    %707 = vmatmul.bf16.gmra.mxu0 %v472
    %v708 = vpop.f32.mrf.mxu0
    %v709 = vadd.f32 0.0, %v708
    %v710 = vpop.f32.mrf.mxu0
    %v711 = vadd.f32 0.0, %v710
    %712 = vmatmul.bf16.gmra.mxu0 %v474
    %v713 = vpop.f32.mrf.mxu0
    %v714 = vadd.f32 0.0, %v713
    %v715 = vpop.f32.mrf.mxu0
    %v716 = vadd.f32 0.0, %v715
    %717 = vmatmul.bf16.gmra.mxu0 %v476
    %v718 = vpop.f32.mrf.mxu0
    %v719 = vadd.f32 0.0, %v718
    %v720 = vpop.f32.mrf.mxu0
    %v721 = vadd.f32 0.0, %v720
    %722 = vmatmul.bf16.gmra.mxu0 %v478
    %v723 = vpop.f32.mrf.mxu0
    %v724 = vadd.f32 0.0, %v723
    %v725 = vpop.f32.mrf.mxu0
    %v726 = vadd.f32 0.0, %v725
    %727 = vmatmul.bf16.gmra.mxu0 %v480
    %v728 = vpop.f32.mrf.mxu0
    %v729 = vadd.f32 0.0, %v728
    %v730 = vpop.f32.mrf.mxu0
    %v731 = vadd.f32 0.0, %v730
    %732 = vmatmul.bf16.gmra.mxu0 %v482
    %v733 = vpop.f32.mrf.mxu0
    %v734 = vadd.f32 0.0, %v733
    %v735 = vpop.f32.mrf.mxu0
    %v736 = vadd.f32 0.0, %v735
    %737 = vmatmul.bf16.gmra.mxu0 %v484
    %v738 = vpop.f32.mrf.mxu0
    %v739 = vadd.f32 0.0, %v738
    %v740 = vpop.f32.mrf.mxu0
    %v741 = vadd.f32 0.0, %v740
    %742 = vmatmul.bf16.gmra.mxu0 %v486
    %v743 = vpop.f32.mrf.mxu0
    %v744 = vadd.f32 0.0, %v743
    %v745 = vpop.f32.mrf.mxu0
    %v746 = vadd.f32 0.0, %v745
    %747 = vmatmul.bf16.gmra.mxu0 %v488
    %v748 = vpop.f32.mrf.mxu0
    %v749 = vadd.f32 0.0, %v748
    %v750 = vpop.f32.mrf.mxu0
    %v751 = vadd.f32 0.0, %v750
    %752 = vmatmul.bf16.gmra.mxu0 %v490
    %v753 = vpop.f32.mrf.mxu0
    %v754 = vadd.f32 0.0, %v753
    %v755 = vpop.f32.mrf.mxu0
    %v756 = vadd.f32 0.0, %v755
    %757 = vmatmul.bf16.gmra.mxu0 %v492
    %v758 = vpop.f32.mrf.mxu0
    %v759 = vadd.f32 0.0, %v758
    %v760 = vpop.f32.mrf.mxu0
    %v761 = vadd.f32 0.0, %v760
    %762 = vmatmul.bf16.gmra.mxu0 %v494
    %v763 = vpop.f32.mrf.mxu0
    %v764 = vadd.f32 0.0, %v763
    %v765 = vpop.f32.mrf.mxu0
    %v766 = vadd.f32 0.0, %v765
    %767 = vmatmul.bf16.gmra.mxu0 %v496
    %v768 = vpop.f32.mrf.mxu0
    %v769 = vadd.f32 0.0, %v768
    %v770 = vpop.f32.mrf.mxu0
    %v771 = vadd.f32 0.0, %v770
    %772 = vmatmul.bf16.gmra.mxu0 %v498
    %v773 = vpop.f32.mrf.mxu0
    %v774 = vadd.f32 0.0, %v773
    %v775 = vpop.f32.mrf.mxu0
    %v776 = vadd.f32 0.0, %v775
    %777 = vmatmul.bf16.gmra.mxu0 %v500
    %v778 = vpop.f32.mrf.mxu0
    %v779 = vadd.f32 0.0, %v778
    %v780 = vpop.f32.mrf.mxu0
    %v781 = vadd.f32 0.0, %v780
    %782 = vmatmul.bf16.gmra.mxu0 %v502
    %v783 = vpop.f32.mrf.mxu0
    %v784 = vadd.f32 0.0, %v783
    %v785 = vpop.f32.mrf.mxu0
    %v786 = vadd.f32 0.0, %v785
    %787 = vmatmul.bf16.gmra.mxu0 %v504
    %v788 = vpop.f32.mrf.mxu0
    %v789 = vadd.f32 0.0, %v788
    %v790 = vpop.f32.mrf.mxu0
    %v791 = vadd.f32 0.0, %v790
    %792 = vmatmul.bf16.gmra.mxu0 %v506
    %v793 = vpop.f32.mrf.mxu0
    %v794 = vadd.f32 0.0, %v793
    %v795 = vpop.f32.mrf.mxu0
    %v796 = vadd.f32 0.0, %v795
    %797 = vmatmul.bf16.gmra.mxu0 %v508
    %v798 = vpop.f32.mrf.mxu0
    %v799 = vadd.f32 0.0, %v798
    %v800 = vpop.f32.mrf.mxu0
    %v801 = vadd.f32 0.0, %v800
    %802 = vmatmul.bf16.gmra.mxu0 %v510
    %v803 = vpop.f32.mrf.mxu0
    %v804 = vadd.f32 0.0, %v803
    %v805 = vpop.f32.mrf.mxu0
    %v806 = vadd.f32 0.0, %v805
    %807 = vmatmul.bf16.gmra.mxu0 %v512
    %v808 = vpop.f32.mrf.mxu0
    %v809 = vadd.f32 0.0, %v808
    %v810 = vpop.f32.mrf.mxu0
    %v811 = vadd.f32 0.0, %v810
    %812 = vmatmul.bf16.gmra.mxu0 %v514
    %v813 = vpop.f32.mrf.mxu0
    %v814 = vadd.f32 0.0, %v813
    %v815 = vpop.f32.mrf.mxu0
    %v816 = vadd.f32 0.0, %v815
    %817 = vmatmul.bf16.gmra.mxu0 %v516
    %v818 = vpop.f32.mrf.mxu0
    %v819 = vadd.f32 0.0, %v818
    %v820 = vpop.f32.mrf.mxu0
    %v821 = vadd.f32 0.0, %v820
    %822 = vmatmul.bf16.gmra.mxu0 %v518
    %v823 = vpop.f32.mrf.mxu0
    %v824 = vadd.f32 0.0, %v823
    %v825 = vpop.f32.mrf.mxu0
    %v826 = vadd.f32 0.0, %v825
    %827 = vmatmul.bf16.gmra.mxu0 %v520
    %v828 = vpop.f32.mrf.mxu0
    %v829 = vadd.f32 0.0, %v828
    %v830 = vpop.f32.mrf.mxu0
    %v831 = vadd.f32 0.0, %v830
    %832 = vmatmul.bf16.gmra.mxu0 %v522
    %v833 = vpop.f32.mrf.mxu0
    %v834 = vadd.f32 0.0, %v833
    %v835 = vpop.f32.mrf.mxu0
    %v836 = vadd.f32 0.0, %v835
    %837 = vmatmul.bf16.gmra.mxu0 %v524
    %v838 = vpop.f32.mrf.mxu0
    %v839 = vadd.f32 0.0, %v838
    %v840 = vpop.f32.mrf.mxu0
    %v841 = vadd.f32 0.0, %v840
    %842 = vmatmul.bf16.gmra.mxu0 %v526
    %v843 = vpop.f32.mrf.mxu0
    %v844 = vadd.f32 0.0, %v843
    %v845 = vpop.f32.mrf.mxu0
    %v846 = vadd.f32 0.0, %v845
    %847 = vmatmul.bf16.gmra.mxu0 %v528
    %v848 = vpop.f32.mrf.mxu0
    %v849 = vadd.f32 0.0, %v848
    %v850 = vpop.f32.mrf.mxu0
    %v851 = vadd.f32 0.0, %v850
    %852 = vmatmul.bf16.gmra.mxu0 %v530
    %v853 = vpop.f32.mrf.mxu0
    %v854 = vadd.f32 0.0, %v853
    %v855 = vpop.f32.mrf.mxu0
    %v856 = vadd.f32 0.0, %v855
    %857 = vmatmul.bf16.gmra.mxu0 %v532
    %v858 = vpop.f32.mrf.mxu0
    %v859 = vadd.f32 0.0, %v858
    %v860 = vpop.f32.mrf.mxu0
    %v861 = vadd.f32 0.0, %v860
    %862 = vdwg.mxu0
    %863 = vmatpush.bf16.msra.mxu0 %v677
    %864 = vmatpush.bf16.msra.mxu0 %v676
    %865 = vmatpush.bf16.msra.mxu0 %v675
    %866 = vmatpush.bf16.msra.mxu0 %v674
    %867 = vmatpush.bf16.msra.mxu0 %v673
    %868 = vmatpush.bf16.msra.mxu0 %v672
    %869 = vmatpush.bf16.msra.mxu0 %v671
    %870 = vmatpush.bf16.msra.mxu0 %v670
    %871 = vmatmul.bf16.gmra.mxu0 %v471
    %v872 = vpop.f32.mrf.mxu0
    %v873 = vadd.f32 %v704, %v872
    %v874 = vpop.f32.mrf.mxu0
    %v875 = vadd.f32 %v706, %v874
    %876 = vmatmul.bf16.gmra.mxu0 %v473
    %v877 = vpop.f32.mrf.mxu0
    %v878 = vadd.f32 %v709, %v877
    %v879 = vpop.f32.mrf.mxu0
    %v880 = vadd.f32 %v711, %v879
    %881 = vmatmul.bf16.gmra.mxu0 %v475
    %v882 = vpop.f32.mrf.mxu0
    %v883 = vadd.f32 %v714, %v882
    %v884 = vpop.f32.mrf.mxu0
    %v885 = vadd.f32 %v716, %v884
    %886 = vmatmul.bf16.gmra.mxu0 %v477
    %v887 = vpop.f32.mrf.mxu0
    %v888 = vadd.f32 %v719, %v887
    %v889 = vpop.f32.mrf.mxu0
    %v890 = vadd.f32 %v721, %v889
    %891 = vmatmul.bf16.gmra.mxu0 %v479
    %v892 = vpop.f32.mrf.mxu0
    %v893 = vadd.f32 %v724, %v892
    %v894 = vpop.f32.mrf.mxu0
    %v895 = vadd.f32 %v726, %v894
    %896 = vmatmul.bf16.gmra.mxu0 %v481
    %v897 = vpop.f32.mrf.mxu0
    %v898 = vadd.f32 %v729, %v897
    %v899 = vpop.f32.mrf.mxu0
    %v900 = vadd.f32 %v731, %v899
    %901 = vmatmul.bf16.gmra.mxu0 %v483
    %v902 = vpop.f32.mrf.mxu0
    %v903 = vadd.f32 %v734, %v902
    %v904 = vpop.f32.mrf.mxu0
    %v905 = vadd.f32 %v736, %v904
    %906 = vmatmul.bf16.gmra.mxu0 %v485
    %v907 = vpop.f32.mrf.mxu0
    %v908 = vadd.f32 %v739, %v907
    %v909 = vpop.f32.mrf.mxu0
    %v910 = vadd.f32 %v741, %v909
    %911 = vmatmul.bf16.gmra.mxu0 %v487
    %v912 = vpop.f32.mrf.mxu0
    %v913 = vadd.f32 %v744, %v912
    %v914 = vpop.f32.mrf.mxu0
    %v915 = vadd.f32 %v746, %v914
    %916 = vmatmul.bf16.gmra.mxu0 %v489
    %v917 = vpop.f32.mrf.mxu0
    %v918 = vadd.f32 %v749, %v917
    %v919 = vpop.f32.mrf.mxu0
    %v920 = vadd.f32 %v751, %v919
    %921 = vmatmul.bf16.gmra.mxu0 %v491
    %v922 = vpop.f32.mrf.mxu0
    %v923 = vadd.f32 %v754, %v922
    %v924 = vpop.f32.mrf.mxu0
    %v925 = vadd.f32 %v756, %v924
    %926 = vmatmul.bf16.gmra.mxu0 %v493
    %v927 = vpop.f32.mrf.mxu0
    %v928 = vadd.f32 %v759, %v927
    %v929 = vpop.f32.mrf.mxu0
    %v930 = vadd.f32 %v761, %v929
    %931 = vmatmul.bf16.gmra.mxu0 %v495
    %v932 = vpop.f32.mrf.mxu0
    %v933 = vadd.f32 %v764, %v932
    %v934 = vpop.f32.mrf.mxu0
    %v935 = vadd.f32 %v766, %v934
    %936 = vmatmul.bf16.gmra.mxu0 %v497
    %v937 = vpop.f32.mrf.mxu0
    %v938 = vadd.f32 %v769, %v937
    %v939 = vpop.f32.mrf.mxu0
    %v940 = vadd.f32 %v771, %v939
    %941 = vmatmul.bf16.gmra.mxu0 %v499
    %v942 = vpop.f32.mrf.mxu0
    %v943 = vadd.f32 %v774, %v942
    %v944 = vpop.f32.mrf.mxu0
    %v945 = vadd.f32 %v776, %v944
    %946 = vmatmul.bf16.gmra.mxu0 %v501
    %v947 = vpop.f32.mrf.mxu0
    %v948 = vadd.f32 %v779, %v947
    %v949 = vpop.f32.mrf.mxu0
    %v950 = vadd.f32 %v781, %v949
    %951 = vmatmul.bf16.gmra.mxu0 %v503
    %v952 = vpop.f32.mrf.mxu0
    %v953 = vadd.f32 %v784, %v952
    %v954 = vpop.f32.mrf.mxu0
    %v955 = vadd.f32 %v786, %v954
    %956 = vmatmul.bf16.gmra.mxu0 %v505
    %v957 = vpop.f32.mrf.mxu0
    %v958 = vadd.f32 %v789, %v957
    %v959 = vpop.f32.mrf.mxu0
    %v960 = vadd.f32 %v791, %v959
    %961 = vmatmul.bf16.gmra.mxu0 %v507
    %v962 = vpop.f32.mrf.mxu0
    %v963 = vadd.f32 %v794, %v962
    %v964 = vpop.f32.mrf.mxu0
    %v965 = vadd.f32 %v796, %v964
    %966 = vmatmul.bf16.gmra.mxu0 %v509
    %v967 = vpop.f32.mrf.mxu0
    %v968 = vadd.f32 %v799, %v967
    %v969 = vpop.f32.mrf.mxu0
    %v970 = vadd.f32 %v801, %v969
    %971 = vmatmul.bf16.gmra.mxu0 %v511
    %v972 = vpop.f32.mrf.mxu0
    %v973 = vadd.f32 %v804, %v972
    %v974 = vpop.f32.mrf.mxu0
    %v975 = vadd.f32 %v806, %v974
    %976 = vmatmul.bf16.gmra.mxu0 %v513
    %v977 = vpop.f32.mrf.mxu0
    %v978 = vadd.f32 %v809, %v977
    %v979 = vpop.f32.mrf.mxu0
    %v980 = vadd.f32 %v811, %v979
    %981 = vmatmul.bf16.gmra.mxu0 %v515
    %v982 = vpop.f32.mrf.mxu0
    %v983 = vadd.f32 %v814, %v982
    %v984 = vpop.f32.mrf.mxu0
    %v985 = vadd.f32 %v816, %v984
    %986 = vmatmul.bf16.gmra.mxu0 %v517
    %v987 = vpop.f32.mrf.mxu0
    %v988 = vadd.f32 %v819, %v987
    %v989 = vpop.f32.mrf.mxu0
    %v990 = vadd.f32 %v821, %v989
    %991 = vmatmul.bf16.gmra.mxu0 %v519
    %v992 = vpop.f32.mrf.mxu0
    %v993 = vadd.f32 %v824, %v992
    %v994 = vpop.f32.mrf.mxu0
    %v995 = vadd.f32 %v826, %v994
    %996 = vmatmul.bf16.gmra.mxu0 %v521
    %v997 = vpop.f32.mrf.mxu0
    %v998 = vadd.f32 %v829, %v997
    %v999 = vpop.f32.mrf.mxu0
    %v1000 = vadd.f32 %v831, %v999
    %1001 = vmatmul.bf16.gmra.mxu0 %v523
    %v1002 = vpop.f32.mrf.mxu0
    %v1003 = vadd.f32 %v834, %v1002
    %v1004 = vpop.f32.mrf.mxu0
    %v1005 = vadd.f32 %v836, %v1004
    %1006 = vmatmul.bf16.gmra.mxu0 %v525
    %v1007 = vpop.f32.mrf.mxu0
    %v1008 = vadd.f32 %v839, %v1007
    %v1009 = vpop.f32.mrf.mxu0
    %v1010 = vadd.f32 %v841, %v1009
    %1011 = vmatmul.bf16.gmra.mxu0 %v527
    %v1012 = vpop.f32.mrf.mxu0
    %v1013 = vadd.f32 %v844, %v1012
    %v1014 = vpop.f32.mrf.mxu0
    %v1015 = vadd.f32 %v846, %v1014
    %1016 = vmatmul.bf16.gmra.mxu0 %v529
    %v1017 = vpop.f32.mrf.mxu0
    %v1018 = vadd.f32 %v849, %v1017
    %v1019 = vpop.f32.mrf.mxu0
    %v1020 = vadd.f32 %v851, %v1019
    %1021 = vmatmul.bf16.gmra.mxu0 %v531
    %v1022 = vpop.f32.mrf.mxu0
    %v1023 = vadd.f32 %v854, %v1022
    %v1024 = vpop.f32.mrf.mxu0
    %v1025 = vadd.f32 %v856, %v1024
    %1026 = vmatmul.bf16.gmra.mxu0 %v533
    %v1027 = vpop.f32.mrf.mxu0
    %v1028 = vadd.f32 %v859, %v1027
    %v1029 = vpop.f32.mrf.mxu0
    %v1030 = vadd.f32 %v861, %v1029
    %1031 = vdwg.mxu0
    %v1032 = vadd.f32 %v118, %v873
    %v1033 = vadd.f32 %v119, %v875
    %v1034 = vadd.f32 %v120, %v878
    %v1035 = vadd.f32 %v121, %v880
    %v1036 = vadd.f32 %v122, %v883
    %v1037 = vadd.f32 %v123, %v885
    %v1038 = vadd.f32 %v124, %v888
    %v1039 = vadd.f32 %v125, %v890
    %v1040 = vadd.f32 %v126, %v893
    %v1041 = vadd.f32 %v127, %v895
    %v1042 = vadd.f32 %v128, %v898
    %v1043 = vadd.f32 %v129, %v900
    %v1044 = vadd.f32 %v130, %v903
    %v1045 = vadd.f32 %v131, %v905
    %v1046 = vadd.f32 %v132, %v908
    %v1047 = vadd.f32 %v133, %v910
    %v1048 = vadd.f32 %v134, %v913
    %v1049 = vadd.f32 %v135, %v915
    %v1050 = vadd.f32 %v136, %v918
    %v1051 = vadd.f32 %v137, %v920
    %v1052 = vadd.f32 %v138, %v923
    %v1053 = vadd.f32 %v139, %v925
    %v1054 = vadd.f32 %v140, %v928
    %v1055 = vadd.f32 %v141, %v930
    %v1056 = vadd.f32 %v142, %v933
    %v1057 = vadd.f32 %v143, %v935
    %v1058 = vadd.f32 %v144, %v938
    %v1059 = vadd.f32 %v145, %v940
    %v1060 = vadd.f32 %v146, %v943
    %v1061 = vadd.f32 %v147, %v945
    %v1062 = vadd.f32 %v148, %v948
    %v1063 = vadd.f32 %v149, %v950
    %v1064 = vadd.f32 %v150, %v953
    %v1065 = vadd.f32 %v151, %v955
    %v1066 = vadd.f32 %v152, %v958
    %v1067 = vadd.f32 %v153, %v960
    %v1068 = vadd.f32 %v154, %v963
    %v1069 = vadd.f32 %v155, %v965
    %v1070 = vadd.f32 %v156, %v968
    %v1071 = vadd.f32 %v157, %v970
    %v1072 = vadd.f32 %v158, %v973
    %v1073 = vadd.f32 %v159, %v975
    %v1074 = vadd.f32 %v160, %v978
    %v1075 = vadd.f32 %v161, %v980
    %v1076 = vadd.f32 %v162, %v983
    %v1077 = vadd.f32 %v163, %v985
    %v1078 = vadd.f32 %v164, %v988
    %v1079 = vadd.f32 %v165, %v990
    %v1080 = vadd.f32 %v166, %v993
    %v1081 = vadd.f32 %v167, %v995
    %v1082 = vadd.f32 %v168, %v998
    %v1083 = vadd.f32 %v169, %v1000
    %v1084 = vadd.f32 %v170, %v1003
    %v1085 = vadd.f32 %v171, %v1005
    %v1086 = vadd.f32 %v172, %v1008
    %v1087 = vadd.f32 %v173, %v1010
    %v1088 = vadd.f32 %v174, %v1013
    %v1089 = vadd.f32 %v175, %v1015
    %v1090 = vadd.f32 %v176, %v1018
    %v1091 = vadd.f32 %v177, %v1020
    %v1092 = vadd.f32 %v178, %v1023
    %v1093 = vadd.f32 %v179, %v1025
    %v1094 = vadd.f32 %v180, %v1028
    %v1095 = vadd.f32 %v181, %v1030
    %1096 = vst [vmem:[#allocation7] sm:$0xff] %v1032
    %1097 = vst [vmem:[#allocation7 + $0x8] sm:$0xff] %v1033
    %1098 = vst [vmem:[#allocation7 + $0x10] sm:$0xff] %v1034
    %1099 = vst [vmem:[#allocation7 + $0x18] sm:$0xff] %v1035
    %1100 = vst [vmem:[#allocation7 + $0x20] sm:$0xff] %v1036
    %1101 = vst [vmem:[#allocation7 + $0x28] sm:$0xff] %v1037
    %1102 = vst [vmem:[#allocation7 + $0x30] sm:$0xff] %v1038
    %1103 = vst [vmem:[#allocation7 + $0x38] sm:$0xff] %v1039
    %1104 = vst [vmem:[#allocation7 + $0x40] sm:$0xff] %v1040
    %1105 = vst [vmem:[#allocation7 + $0x48] sm:$0xff] %v1041
    %1106 = vst [vmem:[#allocation7 + $0x50] sm:$0xff] %v1042
    %1107 = vst [vmem:[#allocation7 + $0x58] sm:$0xff] %v1043
    %1108 = vst [vmem:[#allocation7 + $0x60] sm:$0xff] %v1044
    %1109 = vst [vmem:[#allocation7 + $0x68] sm:$0xff] %v1045
    %1110 = vst [vmem:[#allocation7 + $0x70] sm:$0xff] %v1046
    %1111 = vst [vmem:[#allocation7 + $0x78] sm:$0xff] %v1047
    %1112 = vst [vmem:[#allocation7 + $0x80] sm:$0xff] %v1048
    %1113 = vst [vmem:[#allocation7 + $0x88] sm:$0xff] %v1049
    %1114 = vst [vmem:[#allocation7 + $0x90] sm:$0xff] %v1050
    %1115 = vst [vmem:[#allocation7 + $0x98] sm:$0xff] %v1051
    %1116 = vst [vmem:[#allocation7 + $0xa0] sm:$0xff] %v1052
    %1117 = vst [vmem:[#allocation7 + $0xa8] sm:$0xff] %v1053
    %1118 = vst [vmem:[#allocation7 + $0xb0] sm:$0xff] %v1054
    %1119 = vst [vmem:[#allocation7 + $0xb8] sm:$0xff] %v1055
    %1120 = vst [vmem:[#allocation7 + $0xc0] sm:$0xff] %v1056
    %1121 = vst [vmem:[#allocation7 + $0xc8] sm:$0xff] %v1057
    %1122 = vst [vmem:[#allocation7 + $0xd0] sm:$0xff] %v1058
    %1123 = vst [vmem:[#allocation7 + $0xd8] sm:$0xff] %v1059
    %1124 = vst [vmem:[#allocation7 + $0xe0] sm:$0xff] %v1060
    %1125 = vst [vmem:[#allocation7 + $0xe8] sm:$0xff] %v1061
    %1126 = vst [vmem:[#allocation7 + $0xf0] sm:$0xff] %v1062
    %1127 = vst [vmem:[#allocation7 + $0xf8] sm:$0xff] %v1063
    %1128 = vst [vmem:[#allocation7 + $0x100] sm:$0xff] %v1064
    %1129 = vst [vmem:[#allocation7 + $0x108] sm:$0xff] %v1065
    %1130 = vst [vmem:[#allocation7 + $0x110] sm:$0xff] %v1066
    %1131 = vst [vmem:[#allocation7 + $0x118] sm:$0xff] %v1067
    %1132 = vst [vmem:[#allocation7 + $0x120] sm:$0xff] %v1068
    %1133 = vst [vmem:[#allocation7 + $0x128] sm:$0xff] %v1069
    %1134 = vst [vmem:[#allocation7 + $0x130] sm:$0xff] %v1070
    %1135 = vst [vmem:[#allocation7 + $0x138] sm:$0xff] %v1071
    %1136 = vst [vmem:[#allocation7 + $0x140] sm:$0xff] %v1072
    %1137 = vst [vmem:[#allocation7 + $0x148] sm:$0xff] %v1073
    %1138 = vst [vmem:[#allocation7 + $0x150] sm:$0xff] %v1074
    %1139 = vst [vmem:[#allocation7 + $0x158] sm:$0xff] %v1075
    %1140 = vst [vmem:[#allocation7 + $0x160] sm:$0xff] %v1076
    %1141 = vst [vmem:[#allocation7 + $0x168] sm:$0xff] %v1077
    %1142 = vst [vmem:[#allocation7 + $0x170] sm:$0xff] %v1078
    %1143 = vst [vmem:[#allocation7 + $0x178] sm:$0xff] %v1079
    %1144 = vst [vmem:[#allocation7 + $0x180] sm:$0xff] %v1080
    %1145 = vst [vmem:[#allocation7 + $0x188] sm:$0xff] %v1081
    %1146 = vst [vmem:[#allocation7 + $0x190] sm:$0xff] %v1082
    %1147 = vst [vmem:[#allocation7 + $0x198] sm:$0xff] %v1083
    %1148 = vst [vmem:[#allocation7 + $0x1a0] sm:$0xff] %v1084
    %1149 = vst [vmem:[#allocation7 + $0x1a8] sm:$0xff] %v1085
    %1150 = vst [vmem:[#allocation7 + $0x1b0] sm:$0xff] %v1086
    %1151 = vst [vmem:[#allocation7 + $0x1b8] sm:$0xff] %v1087
    %1152 = vst [vmem:[#allocation7 + $0x1c0] sm:$0xff] %v1088
    %1153 = vst [vmem:[#allocation7 + $0x1c8] sm:$0xff] %v1089
    %1154 = vst [vmem:[#allocation7 + $0x1d0] sm:$0xff] %v1090
    %1155 = vst [vmem:[#allocation7 + $0x1d8] sm:$0xff] %v1091
    %1156 = vst [vmem:[#allocation7 + $0x1e0] sm:$0xff] %v1092
    %1157 = vst [vmem:[#allocation7 + $0x1e8] sm:$0xff] %v1093
    %1158 = vst [vmem:[#allocation7 + $0x1f0] sm:$0xff] %v1094
    %1159 = vst [vmem:[#allocation7 + $0x1f8] sm:$0xff] %v1095
    // Predicated region
    $region30: #{tpu_custom_call.1} parent=1 // pred_check
      %p1160 = pneg %p50
    $region31: #{tpu_custom_call.1} parent=1 // pred_check_branch
      %1162 = sbr.rel (%p1160) target = $region33
    $region32: #{tpu_custom_call.1} parent=1 // pred_region
      %v1163 = vld [vmem:[#allocation7] sm:$0xff]
      %v1164 = vld [vmem:[#allocation7 + $0x8] sm:$0xff]
      %v1165 = vld [vmem:[#allocation7 + $0x10] sm:$0xff]
      %v1166 = vld [vmem:[#allocation7 + $0x18] sm:$0xff]
      %v1167 = vld [vmem:[#allocation7 + $0x20] sm:$0xff]
      %v1168 = vld [vmem:[#allocation7 + $0x28] sm:$0xff]
      %v1169 = vld [vmem:[#allocation7 + $0x30] sm:$0xff]
      %v1170 = vld [vmem:[#allocation7 + $0x38] sm:$0xff]
      %v1171 = vld [vmem:[#allocation7 + $0x40] sm:$0xff]
      %v1172 = vld [vmem:[#allocation7 + $0x48] sm:$0xff]
      %v1173 = vld [vmem:[#allocation7 + $0x50] sm:$0xff]
      %v1174 = vld [vmem:[#allocation7 + $0x58] sm:$0xff]
      %v1175 = vld [vmem:[#allocation7 + $0x60] sm:$0xff]
      %v1176 = vld [vmem:[#allocation7 + $0x68] sm:$0xff]
      %v1177 = vld [vmem:[#allocation7 + $0x70] sm:$0xff]
      %v1178 = vld [vmem:[#allocation7 + $0x78] sm:$0xff]
      %v1179 = vld [vmem:[#allocation7 + $0x80] sm:$0xff]
      %v1180 = vld [vmem:[#allocation7 + $0x88] sm:$0xff]
      %v1181 = vld [vmem:[#allocation7 + $0x90] sm:$0xff]
      %v1182 = vld [vmem:[#allocation7 + $0x98] sm:$0xff]
      %v1183 = vld [vmem:[#allocation7 + $0xa0] sm:$0xff]
      %v1184 = vld [vmem:[#allocation7 + $0xa8] sm:$0xff]
      %v1185 = vld [vmem:[#allocation7 + $0xb0] sm:$0xff]
      %v1186 = vld [vmem:[#allocation7 + $0xb8] sm:$0xff]
      %v1187 = vld [vmem:[#allocation7 + $0xc0] sm:$0xff]
      %v1188 = vld [vmem:[#allocation7 + $0xc8] sm:$0xff]
      %v1189 = vld [vmem:[#allocation7 + $0xd0] sm:$0xff]
      %v1190 = vld [vmem:[#allocation7 + $0xd8] sm:$0xff]
      %v1191 = vld [vmem:[#allocation7 + $0xe0] sm:$0xff]
      %v1192 = vld [vmem:[#allocation7 + $0xe8] sm:$0xff]
      %v1193 = vld [vmem:[#allocation7 + $0xf0] sm:$0xff]
      %v1194 = vld [vmem:[#allocation7 + $0xf8] sm:$0xff]
      %v1195 = vld [vmem:[#allocation7 + $0x100] sm:$0xff]
      %v1196 = vld [vmem:[#allocation7 + $0x108] sm:$0xff]
      %v1197 = vld [vmem:[#allocation7 + $0x110] sm:$0xff]
      %v1198 = vld [vmem:[#allocation7 + $0x118] sm:$0xff]
      %v1199 = vld [vmem:[#allocation7 + $0x120] sm:$0xff]
      %v1200 = vld [vmem:[#allocation7 + $0x128] sm:$0xff]
      %v1201 = vld [vmem:[#allocation7 + $0x130] sm:$0xff]
      %v1202 = vld [vmem:[#allocation7 + $0x138] sm:$0xff]
      %v1203 = vld [vmem:[#allocation7 + $0x140] sm:$0xff]
      %v1204 = vld [vmem:[#allocation7 + $0x148] sm:$0xff]
      %v1205 = vld [vmem:[#allocation7 + $0x150] sm:$0xff]
      %v1206 = vld [vmem:[#allocation7 + $0x158] sm:$0xff]
      %v1207 = vld [vmem:[#allocation7 + $0x160] sm:$0xff]
      %v1208 = vld [vmem:[#allocation7 + $0x168] sm:$0xff]
      %v1209 = vld [vmem:[#allocation7 + $0x170] sm:$0xff]
      %v1210 = vld [vmem:[#allocation7 + $0x178] sm:$0xff]
      %v1211 = vld [vmem:[#allocation7 + $0x180] sm:$0xff]
      %v1212 = vld [vmem:[#allocation7 + $0x188] sm:$0xff]
      %v1213 = vld [vmem:[#allocation7 + $0x190] sm:$0xff]
      %v1214 = vld [vmem:[#allocation7 + $0x198] sm:$0xff]
      %v1215 = vld [vmem:[#allocation7 + $0x1a0] sm:$0xff]
      %v1216 = vld [vmem:[#allocation7 + $0x1a8] sm:$0xff]
      %v1217 = vld [vmem:[#allocation7 + $0x1b0] sm:$0xff]
      %v1218 = vld [vmem:[#allocation7 + $0x1b8] sm:$0xff]
      %v1219 = vld [vmem:[#allocation7 + $0x1c0] sm:$0xff]
      %v1220 = vld [vmem:[#allocation7 + $0x1c8] sm:$0xff]
      %v1221 = vld [vmem:[#allocation7 + $0x1d0] sm:$0xff]
      %v1222 = vld [vmem:[#allocation7 + $0x1d8] sm:$0xff]
      %v1223 = vld [vmem:[#allocation7 + $0x1e0] sm:$0xff]
      %v1224 = vld [vmem:[#allocation7 + $0x1e8] sm:$0xff]
      %v1225 = vld [vmem:[#allocation7 + $0x1f0] sm:$0xff]
      %v1226 = vld [vmem:[#allocation7 + $0x1f8] sm:$0xff]
      %v1227 = vld [vmem:[%s2] sm:$0x1]
      %v1229 = vperm.slane %v1227, 0
      %v1231 = vmul.f32 %v1163, %v1229
      %v1232 = vmul.f32 %v1164, %v1229
      %v1233 = vmul.f32 %v1165, %v1229
      %v1234 = vmul.f32 %v1166, %v1229
      %v1235 = vmul.f32 %v1167, %v1229
      %v1236 = vmul.f32 %v1168, %v1229
      %v1237 = vmul.f32 %v1169, %v1229
      %v1238 = vmul.f32 %v1170, %v1229
      %v1239 = vmul.f32 %v1171, %v1229
      %v1240 = vmul.f32 %v1172, %v1229
      %v1241 = vmul.f32 %v1173, %v1229
      %v1242 = vmul.f32 %v1174, %v1229
      %v1243 = vmul.f32 %v1175, %v1229
      %v1244 = vmul.f32 %v1176, %v1229
      %v1245 = vmul.f32 %v1177, %v1229
      %v1246 = vmul.f32 %v1178, %v1229
      %v1247 = vmul.f32 %v1179, %v1229
      %v1248 = vmul.f32 %v1180, %v1229
      %v1249 = vmul.f32 %v1181, %v1229
      %v1250 = vmul.f32 %v1182, %v1229
      %v1251 = vmul.f32 %v1183, %v1229
      %v1252 = vmul.f32 %v1184, %v1229
      %v1253 = vmul.f32 %v1185, %v1229
      %v1254 = vmul.f32 %v1186, %v1229
      %v1255 = vmul.f32 %v1187, %v1229
      %v1256 = vmul.f32 %v1188, %v1229
      %v1257 = vmul.f32 %v1189, %v1229
      %v1258 = vmul.f32 %v1190, %v1229
      %v1259 = vmul.f32 %v1191, %v1229
      %v1260 = vmul.f32 %v1192, %v1229
      %v1261 = vmul.f32 %v1193, %v1229
      %v1262 = vmul.f32 %v1194, %v1229
      %v1263 = vmul.f32 %v1195, %v1229
      %v1264 = vmul.f32 %v1196, %v1229
      %v1265 = vmul.f32 %v1197, %v1229
      %v1266 = vmul.f32 %v1198, %v1229
      %v1267 = vmul.f32 %v1199, %v1229
      %v1268 = vmul.f32 %v1200, %v1229
      %v1269 = vmul.f32 %v1201, %v1229
      %v1270 = vmul.f32 %v1202, %v1229
      %v1271 = vmul.f32 %v1203, %v1229
      %v1272 = vmul.f32 %v1204, %v1229
      %v1273 = vmul.f32 %v1205, %v1229
      %v1274 = vmul.f32 %v1206, %v1229
      %v1275 = vmul.f32 %v1207, %v1229
      %v1276 = vmul.f32 %v1208, %v1229
      %v1277 = vmul.f32 %v1209, %v1229
      %v1278 = vmul.f32 %v1210, %v1229
      %v1279 = vmul.f32 %v1211, %v1229
      %v1280 = vmul.f32 %v1212, %v1229
      %v1281 = vmul.f32 %v1213, %v1229
      %v1282 = vmul.f32 %v1214, %v1229
      %v1283 = vmul.f32 %v1215, %v1229
      %v1284 = vmul.f32 %v1216, %v1229
      %v1285 = vmul.f32 %v1217, %v1229
      %v1286 = vmul.f32 %v1218, %v1229
      %v1287 = vmul.f32 %v1219, %v1229
      %v1288 = vmul.f32 %v1220, %v1229
      %v1289 = vmul.f32 %v1221, %v1229
      %v1290 = vmul.f32 %v1222, %v1229
      %v1291 = vmul.f32 %v1223, %v1229
      %v1292 = vmul.f32 %v1224, %v1229
      %v1293 = vmul.f32 %v1225, %v1229
      %v1294 = vmul.f32 %v1226, %v1229
      %v1295 = vld [vmem:[%s3] sm:$0x1]
      %v1297 = vperm.slane %v1295, 0
      %v1299 = vadd.f32 %v1231, %v1297
      %v1300 = vadd.f32 %v1232, %v1297
      %v1301 = vadd.f32 %v1233, %v1297
      %v1302 = vadd.f32 %v1234, %v1297
      %v1303 = vadd.f32 %v1235, %v1297
      %v1304 = vadd.f32 %v1236, %v1297
      %v1305 = vadd.f32 %v1237, %v1297
      %v1306 = vadd.f32 %v1238, %v1297
      %v1307 = vadd.f32 %v1239, %v1297
      %v1308 = vadd.f32 %v1240, %v1297
      %v1309 = vadd.f32 %v1241, %v1297
      %v1310 = vadd.f32 %v1242, %v1297
      %v1311 = vadd.f32 %v1243, %v1297
      %v1312 = vadd.f32 %v1244, %v1297
      %v1313 = vadd.f32 %v1245, %v1297
      %v1314 = vadd.f32 %v1246, %v1297
      %v1315 = vadd.f32 %v1247, %v1297
      %v1316 = vadd.f32 %v1248, %v1297
      %v1317 = vadd.f32 %v1249, %v1297
      %v1318 = vadd.f32 %v1250, %v1297
      %v1319 = vadd.f32 %v1251, %v1297
      %v1320 = vadd.f32 %v1252, %v1297
      %v1321 = vadd.f32 %v1253, %v1297
      %v1322 = vadd.f32 %v1254, %v1297
      %v1323 = vadd.f32 %v1255, %v1297
      %v1324 = vadd.f32 %v1256, %v1297
      %v1325 = vadd.f32 %v1257, %v1297
      %v1326 = vadd.f32 %v1258, %v1297
      %v1327 = vadd.f32 %v1259, %v1297
      %v1328 = vadd.f32 %v1260, %v1297
      %v1329 = vadd.f32 %v1261, %v1297
      %v1330 = vadd.f32 %v1262, %v1297
      %v1331 = vadd.f32 %v1263, %v1297
      %v1332 = vadd.f32 %v1264, %v1297
      %v1333 = vadd.f32 %v1265, %v1297
      %v1334 = vadd.f32 %v1266, %v1297
      %v1335 = vadd.f32 %v1267, %v1297
      %v1336 = vadd.f32 %v1268, %v1297
      %v1337 = vadd.f32 %v1269, %v1297
      %v1338 = vadd.f32 %v1270, %v1297
      %v1339 = vadd.f32 %v1271, %v1297
      %v1340 = vadd.f32 %v1272, %v1297
      %v1341 = vadd.f32 %v1273, %v1297
      %v1342 = vadd.f32 %v1274, %v1297
      %v1343 = vadd.f32 %v1275, %v1297
      %v1344 = vadd.f32 %v1276, %v1297
      %v1345 = vadd.f32 %v1277, %v1297
      %v1346 = vadd.f32 %v1278, %v1297
      %v1347 = vadd.f32 %v1279, %v1297
      %v1348 = vadd.f32 %v1280, %v1297
      %v1349 = vadd.f32 %v1281, %v1297
      %v1350 = vadd.f32 %v1282, %v1297
      %v1351 = vadd.f32 %v1283, %v1297
      %v1352 = vadd.f32 %v1284, %v1297
      %v1353 = vadd.f32 %v1285, %v1297
      %v1354 = vadd.f32 %v1286, %v1297
      %v1355 = vadd.f32 %v1287, %v1297
      %v1356 = vadd.f32 %v1288, %v1297
      %v1357 = vadd.f32 %v1289, %v1297
      %v1358 = vadd.f32 %v1290, %v1297
      %v1359 = vadd.f32 %v1291, %v1297
      %v1360 = vadd.f32 %v1292, %v1297
      %v1361 = vadd.f32 %v1293, %v1297
      %v1362 = vadd.f32 %v1294, %v1297
      %v1363 = vmax.f32 %v1299, 0.0
      %v1364 = vmax.f32 %v1300, 0.0
      %v1365 = vmax.f32 %v1301, 0.0
      %v1366 = vmax.f32 %v1302, 0.0
      %v1367 = vmax.f32 %v1303, 0.0
      %v1368 = vmax.f32 %v1304, 0.0
      %v1369 = vmax.f32 %v1305, 0.0
      %v1370 = vmax.f32 %v1306, 0.0
      %v1371 = vmax.f32 %v1307, 0.0
      %v1372 = vmax.f32 %v1308, 0.0
      %v1373 = vmax.f32 %v1309, 0.0
      %v1374 = vmax.f32 %v1310, 0.0
      %v1375 = vmax.f32 %v1311, 0.0
      %v1376 = vmax.f32 %v1312, 0.0
      %v1377 = vmax.f32 %v1313, 0.0
      %v1378 = vmax.f32 %v1314, 0.0
      %v1379 = vmax.f32 %v1315, 0.0
      %v1380 = vmax.f32 %v1316, 0.0
      %v1381 = vmax.f32 %v1317, 0.0
      %v1382 = vmax.f32 %v1318, 0.0
      %v1383 = vmax.f32 %v1319, 0.0
      %v1384 = vmax.f32 %v1320, 0.0
      %v1385 = vmax.f32 %v1321, 0.0
      %v1386 = vmax.f32 %v1322, 0.0
      %v1387 = vmax.f32 %v1323, 0.0
      %v1388 = vmax.f32 %v1324, 0.0
      %v1389 = vmax.f32 %v1325, 0.0
      %v1390 = vmax.f32 %v1326, 0.0
      %v1391 = vmax.f32 %v1327, 0.0
      %v1392 = vmax.f32 %v1328, 0.0
      %v1393 = vmax.f32 %v1329, 0.0
      %v1394 = vmax.f32 %v1330, 0.0
      %v1395 = vmax.f32 %v1331, 0.0
      %v1396 = vmax.f32 %v1332, 0.0
      %v1397 = vmax.f32 %v1333, 0.0
      %v1398 = vmax.f32 %v1334, 0.0
      %v1399 = vmax.f32 %v1335, 0.0
      %v1400 = vmax.f32 %v1336, 0.0
      %v1401 = vmax.f32 %v1337, 0.0
      %v1402 = vmax.f32 %v1338, 0.0
      %v1403 = vmax.f32 %v1339, 0.0
      %v1404 = vmax.f32 %v1340, 0.0
      %v1405 = vmax.f32 %v1341, 0.0
      %v1406 = vmax.f32 %v1342, 0.0
      %v1407 = vmax.f32 %v1343, 0.0
      %v1408 = vmax.f32 %v1344, 0.0
      %v1409 = vmax.f32 %v1345, 0.0
      %v1410 = vmax.f32 %v1346, 0.0
      %v1411 = vmax.f32 %v1347, 0.0
      %v1412 = vmax.f32 %v1348, 0.0
      %v1413 = vmax.f32 %v1349, 0.0
      %v1414 = vmax.f32 %v1350, 0.0
      %v1415 = vmax.f32 %v1351, 0.0
      %v1416 = vmax.f32 %v1352, 0.0
      %v1417 = vmax.f32 %v1353, 0.0
      %v1418 = vmax.f32 %v1354, 0.0
      %v1419 = vmax.f32 %v1355, 0.0
      %v1420 = vmax.f32 %v1356, 0.0
      %v1421 = vmax.f32 %v1357, 0.0
      %v1422 = vmax.f32 %v1358, 0.0
      %v1423 = vmax.f32 %v1359, 0.0
      %v1424 = vmax.f32 %v1360, 0.0
      %v1425 = vmax.f32 %v1361, 0.0
      %v1426 = vmax.f32 %v1362, 0.0
      %1427 = vst [vmem:[#allocation7] sm:$0xff] %v1363
      %1428 = vst [vmem:[#allocation7 + $0x8] sm:$0xff] %v1364
      %1429 = vst [vmem:[#allocation7 + $0x10] sm:$0xff] %v1365
      %1430 = vst [vmem:[#allocation7 + $0x18] sm:$0xff] %v1366
      %1431 = vst [vmem:[#allocation7 + $0x20] sm:$0xff] %v1367
      %1432 = vst [vmem:[#allocation7 + $0x28] sm:$0xff] %v1368
      %1433 = vst [vmem:[#allocation7 + $0x30] sm:$0xff] %v1369
      %1434 = vst [vmem:[#allocation7 + $0x38] sm:$0xff] %v1370
      %1435 = vst [vmem:[#allocation7 + $0x40] sm:$0xff] %v1371
      %1436 = vst [vmem:[#allocation7 + $0x48] sm:$0xff] %v1372
      %1437 = vst [vmem:[#allocation7 + $0x50] sm:$0xff] %v1373
      %1438 = vst [vmem:[#allocation7 + $0x58] sm:$0xff] %v1374
      %1439 = vst [vmem:[#allocation7 + $0x60] sm:$0xff] %v1375
      %1440 = vst [vmem:[#allocation7 + $0x68] sm:$0xff] %v1376
      %1441 = vst [vmem:[#allocation7 + $0x70] sm:$0xff] %v1377
      %1442 = vst [vmem:[#allocation7 + $0x78] sm:$0xff] %v1378
      %1443 = vst [vmem:[#allocation7 + $0x80] sm:$0xff] %v1379
      %1444 = vst [vmem:[#allocation7 + $0x88] sm:$0xff] %v1380
      %1445 = vst [vmem:[#allocation7 + $0x90] sm:$0xff] %v1381
      %1446 = vst [vmem:[#allocation7 + $0x98] sm:$0xff] %v1382
      %1447 = vst [vmem:[#allocation7 + $0xa0] sm:$0xff] %v1383
      %1448 = vst [vmem:[#allocation7 + $0xa8] sm:$0xff] %v1384
      %1449 = vst [vmem:[#allocation7 + $0xb0] sm:$0xff] %v1385
      %1450 = vst [vmem:[#allocation7 + $0xb8] sm:$0xff] %v1386
      %1451 = vst [vmem:[#allocation7 + $0xc0] sm:$0xff] %v1387
      %1452 = vst [vmem:[#allocation7 + $0xc8] sm:$0xff] %v1388
      %1453 = vst [vmem:[#allocation7 + $0xd0] sm:$0xff] %v1389
      %1454 = vst [vmem:[#allocation7 + $0xd8] sm:$0xff] %v1390
      %1455 = vst [vmem:[#allocation7 + $0xe0] sm:$0xff] %v1391
      %1456 = vst [vmem:[#allocation7 + $0xe8] sm:$0xff] %v1392
      %1457 = vst [vmem:[#allocation7 + $0xf0] sm:$0xff] %v1393
      %1458 = vst [vmem:[#allocation7 + $0xf8] sm:$0xff] %v1394
      %1459 = vst [vmem:[#allocation7 + $0x100] sm:$0xff] %v1395
      %1460 = vst [vmem:[#allocation7 + $0x108] sm:$0xff] %v1396
      %1461 = vst [vmem:[#allocation7 + $0x110] sm:$0xff] %v1397
      %1462 = vst [vmem:[#allocation7 + $0x118] sm:$0xff] %v1398
      %1463 = vst [vmem:[#allocation7 + $0x120] sm:$0xff] %v1399
      %1464 = vst [vmem:[#allocation7 + $0x128] sm:$0xff] %v1400
      %1465 = vst [vmem:[#allocation7 + $0x130] sm:$0xff] %v1401
      %1466 = vst [vmem:[#allocation7 + $0x138] sm:$0xff] %v1402
      %1467 = vst [vmem:[#allocation7 + $0x140] sm:$0xff] %v1403
      %1468 = vst [vmem:[#allocation7 + $0x148] sm:$0xff] %v1404
      %1469 = vst [vmem:[#allocation7 + $0x150] sm:$0xff] %v1405
      %1470 = vst [vmem:[#allocation7 + $0x158] sm:$0xff] %v1406
      %1471 = vst [vmem:[#allocation7 + $0x160] sm:$0xff] %v1407
      %1472 = vst [vmem:[#allocation7 + $0x168] sm:$0xff] %v1408
      %1473 = vst [vmem:[#allocation7 + $0x170] sm:$0xff] %v1409
      %1474 = vst [vmem:[#allocation7 + $0x178] sm:$0xff] %v1410
      %1475 = vst [vmem:[#allocation7 + $0x180] sm:$0xff] %v1411
      %1476 = vst [vmem:[#allocation7 + $0x188] sm:$0xff] %v1412
      %1477 = vst [vmem:[#allocation7 + $0x190] sm:$0xff] %v1413
      %1478 = vst [vmem:[#allocation7 + $0x198] sm:$0xff] %v1414
      %1479 = vst [vmem:[#allocation7 + $0x1a0] sm:$0xff] %v1415
      %1480 = vst [vmem:[#allocation7 + $0x1a8] sm:$0xff] %v1416
      %1481 = vst [vmem:[#allocation7 + $0x1b0] sm:$0xff] %v1417
      %1482 = vst [vmem:[#allocation7 + $0x1b8] sm:$0xff] %v1418
      %1483 = vst [vmem:[#allocation7 + $0x1c0] sm:$0xff] %v1419
      %1484 = vst [vmem:[#allocation7 + $0x1c8] sm:$0xff] %v1420
      %1485 = vst [vmem:[#allocation7 + $0x1d0] sm:$0xff] %v1421
      %1486 = vst [vmem:[#allocation7 + $0x1d8] sm:$0xff] %v1422
      %1487 = vst [vmem:[#allocation7 + $0x1e0] sm:$0xff] %v1423
      %1488 = vst [vmem:[#allocation7 + $0x1e8] sm:$0xff] %v1424
      %1489 = vst [vmem:[#allocation7 + $0x1f0] sm:$0xff] %v1425
      %1490 = vst [vmem:[#allocation7 + $0x1f8] sm:$0xff] %v1426
    $region33: #{tpu_custom_call.1} parent=1 // pred_fallthru
      _
    // Predicated region
    $region34: #{tpu_custom_call.1} parent=1 // pred_check
      _
    $region35: #{tpu_custom_call.1} parent=1 // pred_check_branch
      %1492 = sbr.rel (0) target = $region37
    $region36: #{tpu_custom_call.1} parent=1 // pred_region
      %1494 = vsyncadd [#allocation4], 0
      %s1495 = sshll.u32 [#allocation7], 4
      %s1496 = int_to_ptr.vmem [resolvable:$true] %s1495
      %s1497 = sshll.u32 %s4, 4
      %s1498 = int_to_ptr.hbm [resolvable:$true] %s1497
      %1503 = dma.vmem_to_hbm [thread:$0]  %s1496, 8192, %s1498, [#allocation4], 128, 128, 8
    $region37: #{tpu_custom_call.1} parent=1 // pred_fallthru
      _
    // Predicated region
    $region38: #{tpu_custom_call.1} parent=1 // pred_check
      _
    $region39: #{tpu_custom_call.1} parent=1 // pred_check_branch
      %1505 = sbr.rel (0) target = $region41
    $region40: #{tpu_custom_call.1} parent=1 // pred_region
      %1507 = dma.done [#allocation4], 8192
    $region41: #{tpu_custom_call.1} parent=1 // pred_fallthru
      _
    %1508 = vsyncpa [#allocation3], 1
    %1509 = vsyncpa [#allocation6], 1
    %1510 = vsyncpa [#allocation4], 1

</llo_original>
